<compile_context>
chip_gen: v7x
topology: tpu7x:2x2x1
jax: 0.10.0
libtpu: 0.0.40
codegen_flags: <defaults>
</compile_context>

<pallas_src>
import jax
import jax.numpy as jnp
from jax.experimental import pallas as pl
from jax.experimental.pallas import tpu as pltpu


_LW = 128      # per-image lane segment (flat spatial plane, row stride S+2)
_NPAR = 4      # stride-2 transposed-conv output parities (row%2, col%2)

# For ConvTranspose2d(k=3, s=2): each output-pixel parity (row%2, col%2) is fed
# by a fixed subset of kernel taps (kh, kw).
_PARITY_TAPS = (
    ((0, 0), (0, 2), (2, 0), (2, 2)),   # (even row, even col)
    ((0, 1), (2, 1)),                   # (even row, odd  col)
    ((1, 0), (1, 2)),                   # (odd  row, even col)
    ((1, 1),),                          # (odd  row, odd  col)
)


def _make_upblock_kernel(S, Cin, Cout, NB):
    """Fused UpBlock kernel.  Layout: channels on sublanes, flat spatial plane
    (row stride S+2) on lanes, NB images side by side on the lane axis."""
    Wp = S + 2                 # row stride of the flat spatial layout
    PF = S * Wp                # flat length of one S x S image
    DOFF = Wp + 1              # flat offset of pixel (0,0) in the implicit halo
    NBL = NB * _LW             # lanes per grid step
    NXT = 9 * 4 * Cout         # rows of the fused transposed-conv tap matmul

    def shift(v, d):
        """result[:, q] = v[:, q - d], zero fill at vacated lanes (static d).

        Cross-image leakage is safe: right shifts pull only zero tail lanes of
        the neighbouring image; left-shift garbage lands in lanes >= PF which
        are always masked / discarded.
        """
        if d == 0:
            return v
        z = jnp.zeros((v.shape[0], abs(d)), v.dtype)
        if d > 0:
            return jnp.concatenate([z, v[:, :NBL - d]], axis=1)
        return jnp.concatenate([v[:, -d:], z], axis=1)

    def kernel(xe_ref, gf_ref, mask_ref, w12_ref, wt_ref, cst_ref, out_ref):
        f32 = jnp.float32
        mask = mask_ref[...]                      # (1, NBL) valid-pixel mask
        cst = cst_ref[...]                        # packed small params
        w12 = w12_ref[...]                        # (2*Cin, 9*Cin)

        b1, b2 = cst[0:Cin, 0:1], cst[0:Cin, 1:2]
        bct, bup = cst[0:Cout, 2:3], cst[0:Cout, 3:4]
        btc2, bga1 = cst[0:Cout, 4:5], cst[0:Cout, 5:6]
        wga2 = cst[0:Cout, 6:7]
        bga2 = cst[0:1, 7:8]
        wga1 = cst[0:Cout, 8:8 + Cout]

        def conv3x3_relu(v, w, b):
            # im2col built fully in registers from 9 statically shifted views
            # (lane shifts on the XLU slot), one MXU matmul, no scratch.
            cols = jnp.concatenate(
                [shift(v, DOFF - (kh * Wp + kw))
                 for kh in range(3) for kw in range(3)], axis=0)   # (9*Cin, NBL)
            y = jnp.dot(w, cols, preferred_element_type=f32)
            return jnp.maximum(y + b, 0.0) * mask    # ReLU + kill halo lanes

        # ---------------- x = CBR(x); x = CBR(x) ---------------------------
        y = conv3x3_relu(xe_ref[0], w12[0:Cin, :], b1)
        y = conv3x3_relu(y, w12[Cin:2 * Cin, :], b2)

        # ------- all four ConvTranspose2d(3, stride=2): polyphase taps -----
        # One block-diagonal matmul produces every tap product:
        #   row = tap*4*Cout + unit*Cout + cout, units = [convtrans, up,
        #   ga.transconv1, ga.transconv2]; columns = [y (Cin) | g (Cout)].
        rhs = jnp.concatenate([y, gf_ref[0]], axis=0)               # (Cin+Cout, NBL)
        tp = jnp.dot(wt_ref[...], rhs, preferred_element_type=f32)  # (NXT, NBL)

        # Per output parity, recombine taps with static in-register shifts.
        s_parts, xup_parts, g2_parts = [], [], []
        for taps in _PARITY_TAPS:
            acc = None
            for kh, kw in taps:
                t = kh * 3 + kw
                piece = shift(tp[t * 4 * Cout:(t + 1) * 4 * Cout],
                              (kh // 2) * Wp + (kw // 2))
                acc = piece if acc is None else acc + piece
            x1 = acc[0 * Cout:1 * Cout] + bct          # self.convtrans(x)
            xup = acc[1 * Cout:2 * Cout] + bup         # self.up(x)
            gg = acc[2 * Cout:3 * Cout]                # ga.transconv1(g), no bias
            g2 = acc[3 * Cout:4 * Cout] + btc2         # ga.transconv2(g)
            s_parts.append(gg + x1)                    # pad2same: identity here
            xup_parts.append(xup)
            g2_parts.append(g2)

        # -------- GA tail fused across all four parities (lane concat) -----
        s_all = jnp.concatenate(s_parts, axis=1)       # (Cout, 4*NBL)
        xup_all = jnp.concatenate(xup_parts, axis=1)
        g2_all = jnp.concatenate(g2_parts, axis=1)

        t_all = jnp.maximum(
            jnp.dot(wga1, s_all, preferred_element_type=f32) + bga1, 0.0)
        a_all = jnp.sum(t_all * wga2, axis=0, keepdims=True) + bga2
        gate = 1.0 / (1.0 + jnp.exp(-a_all))           # exact sigmoid
        out_ref[0] = xup_all + gate * g2_all           # x = up(x) + ga

    return kernel


def upblock_forward(x, g, p, *, batch_per_step=None):
    """UpBlock.forward.  x: (N, Cin, H, W) f32 NCHW, g: (N, Cout, H, W) f32.
    Returns (N, Cout, 2H+1, 2W+1) f32."""
    N, Cin, H, W = x.shape
    Cout = p["ct_w"].shape[1]
    assert H == W, "square inputs assumed by the flat-lane layout"
    assert g.shape == (N, Cout, H, W)
    S = H
    Wp = S + 2
    PF = S * Wp
    assert (S + 1) * Wp + 1 <= _LW, "spatial plane must fit a 128-lane segment (S <= 9)"
    f32 = jnp.float32

    # Images per grid step (batched on the lane axis); keep >= 2 grid steps
    # when possible so both TensorCores get work on v7x.
    NB = batch_per_step if batch_per_step is not None else max(1, min(8, (N + 1) // 2))
    G = -(-N // NB)
    N_pad = G * NB
    NBL = NB * _LW
    NXT = 9 * 4 * Cout

    # ---- input layout prep (tiny one-time XLA ops) -------------------------
    def to_lanes(v):
        C = v.shape[1]
        v = jnp.pad(v.astype(f32),
                    ((0, N_pad - v.shape[0]), (0, 0), (0, 0), (0, Wp - S)))
        v = v.reshape(N_pad, C, PF)
        v = jnp.pad(v, ((0, 0), (0, 0), (0, _LW - PF)))
        return v.reshape(G, NB, C, _LW).transpose(0, 2, 1, 3).reshape(G, C, NBL)

    xe = to_lanes(x)                               # (G, Cin,  NB*128)
    gf = to_lanes(g)                               # (G, Cout, NB*128)
    q = jnp.arange(_LW)
    fmask = jnp.tile(((q < PF) & ((q % Wp) < S)).astype(f32), NB).reshape(1, NBL)

    # ---- weight layout prep -------------------------------------------------
    def conv_w(w):      # (Co, Ci, 3, 3) -> (Co, 9*Ci), tap-major then ci
        co, ci = w.shape[0], w.shape[1]
        return jnp.transpose(w, (0, 2, 3, 1)).reshape(co, 9 * ci).astype(f32)

    w12 = jnp.concatenate([conv_w(p["cbr1_w"]), conv_w(p["cbr2_w"])], axis=0)

    def tap_block(w):   # ConvTranspose2d (Ci, Co, 3, 3) -> (9, Co, Ci), tap-major
        return jnp.transpose(w, (2, 3, 1, 0)).reshape(9, w.shape[1], w.shape[0]).astype(f32)

    zx = jnp.zeros((9, Cout, Cout), f32)
    zg = jnp.zeros((9, Cout, Cin), f32)
    wt_all = jnp.concatenate([
        jnp.concatenate([tap_block(p["ct_w"]), zx], axis=2),      # convtrans
        jnp.concatenate([tap_block(p["up_w"]), zx], axis=2),      # up
        jnp.concatenate([zg, tap_block(p["ga_tc1_w"])], axis=2),  # ga.transconv1
        jnp.concatenate([zg, tap_block(p["ga_tc2_w"])], axis=2),  # ga.transconv2
    ], axis=1).reshape(NXT, Cin + Cout)

    # Packed small params: one const BlockSpec instead of ~9 tiny operands.
    R = max(8, Cin, Cout)
    CW = 8 + Cout
    cst = jnp.zeros((R, CW), f32)
    cst = cst.at[:Cin, 0].set(p["cbr1_b"])
    cst = cst.at[:Cin, 1].set(p["cbr2_b"])
    cst = cst.at[:Cout, 2].set(p["ct_b"])
    cst = cst.at[:Cout, 3].set(p["up_b"])
    cst = cst.at[:Cout, 4].set(p["ga_tc2_b"])
    cst = cst.at[:Cout, 5].set(p["ga_c1_b"])
    cst = cst.at[:Cout, 6].set(p["ga_c2_w"][0, :, 0, 0])
    cst = cst.at[0, 7].set(p["ga_c2_b"][0])
    cst = cst.at[:Cout, 8:8 + Cout].set(p["ga_c1_w"][:, :, 0, 0])

    kernel = _make_upblock_kernel(S, Cin, Cout, NB)
    c2 = lambda n: (0, 0)

    raw = pl.pallas_call(
        kernel,
        out_shape=jax.ShapeDtypeStruct((G, Cout, _NPAR * NBL), f32),
        grid_spec=pltpu.PrefetchScalarGridSpec(
            num_scalar_prefetch=0,
            grid=(G,),
            in_specs=[
                pl.BlockSpec((1, Cin, NBL), lambda n: (n, 0, 0)),   # x images
                pl.BlockSpec((1, Cout, NBL), lambda n: (n, 0, 0)),  # g images
                pl.BlockSpec((1, NBL), c2),                         # valid-pixel mask
                pl.BlockSpec((2 * Cin, 9 * Cin), c2),               # CBR1|CBR2 weights
                pl.BlockSpec((NXT, Cin + Cout), c2),                # fused tap weights
                pl.BlockSpec((R, CW), c2),                          # packed biases etc.
            ],
            out_specs=pl.BlockSpec((1, Cout, _NPAR * NBL), lambda n: (n, 0, 0)),
        ),
        compiler_params=pltpu.CompilerParams(
            dimension_semantics=("parallel",)),
    )(xe, gf, fmask, w12, wt_all, cst)

    # ---- epilogue: interleave the four stride-2 parities (no scatters) -----
    r = raw.reshape(G, Cout, _NPAR, NB, _LW).transpose(0, 3, 1, 2, 4)
    r = r.reshape(N_pad, Cout, _NPAR, _LW)[:N, :, :, :(S + 1) * Wp]
    r = r.reshape(N, Cout, 2, 2, S + 1, Wp)[..., :S + 1]      # [pr, pc, a, b]
    r = r.transpose(0, 1, 4, 2, 5, 3)                         # [a, pr, b, pc]
    out = r.reshape(N, Cout, 2 * (S + 1), 2 * (S + 1))
    return out[:, :, :2 * S + 1, :2 * S + 1]


# ----------------------------------------------------------------------------
# Pure-JAX reference (NCHW, lax.conv) mirroring the PyTorch module.
# ----------------------------------------------------------------------------
def upblock_reference(x, g, p):
    dn = ("NCHW", "OIHW", "NCHW")
    hi = jax.lax.Precision.HIGHEST

    def conv3x3(v, w, b):
        y = jax.lax.conv_general_dilated(v, w, (1, 1), ((1, 1), (1, 1)),
                                         dimension_numbers=dn, precision=hi)
        return y + b.reshape(1, -1, 1, 1)

    def tconv3x3s2(v, w_pt, b=None):
        w = jnp.transpose(w_pt[:, :, ::-1, ::-1], (1, 0, 2, 3))   # flip -> OIHW
        y = jax.lax.conv_general_dilated(v, w, (1, 1), ((2, 2), (2, 2)),
                                         lhs_dilation=(2, 2),
                                         dimension_numbers=dn, precision=hi)
        return y if b is None else y + b.reshape(1, -1, 1, 1)

    h = jax.nn.relu(conv3x3(x, p["cbr1_w"], p["cbr1_b"]))
    h = jax.nn.relu(conv3x3(h, p["cbr2_w"], p["cbr2_b"]))
    x1 = tconv3x3s2(h, p["ct_w"], p["ct_b"])
    xup = tconv3x3s2(h, p["up_w"], p["up_b"])
    g2 = tconv3x3s2(g, p["ga_tc2_w"], p["ga_tc2_b"])
    gg = tconv3x3s2(g, p["ga_tc1_w"], None)
    s = gg + x1                                      # pad2same: identity here
    t = jax.nn.relu(jnp.einsum("oc,nchw->nohw", p["ga_c1_w"][:, :, 0, 0], s,
                               precision=hi) + p["ga_c1_b"].reshape(1, -1, 1, 1))
    a = (jnp.einsum("oc,nchw->nohw", p["ga_c2_w"][:, :, 0, 0], t, precision=hi)
         + p["ga_c2_b"].reshape(1, -1, 1, 1))
    ga = jax.nn.sigmoid(a) * g2
    return xup + ga                                  # pad2same: identity here


# ----------------------------------------------------------------------------
# Deterministic parameter init (shapes from the module's __init__, PyTorch
# layouts; eval-mode BatchNorm folded into the CBR convs).
# ----------------------------------------------------------------------------
def init_params(key, cin, cout):
    ks = jax.random.split(key, 24)
    eps = 1e-5
    p = {}

    def bn_fold(w, b, kg, kb):
        # TODO(synk): assumes running_mean=0, running_var=1 (synthetic init).
        co = w.shape[0]
        gamma = 1.0 + 0.1 * jax.random.normal(kg, (co,), jnp.float32)
        beta = 0.1 * jax.random.normal(kb, (co,), jnp.float32)
        s = gamma / jnp.sqrt(1.0 + eps)
        return w * s[:, None, None, None], b * s + beta

    w = 0.1 * jax.random.normal(ks[0], (cin, cin, 3, 3), jnp.float32)
    b = 0.1 * jax.random.normal(ks[1], (cin,), jnp.float32)
    p["cbr1_w"], p["cbr1_b"] = bn_fold(w, b, ks[2], ks[3])
    w = 0.1 * jax.random.normal(ks[4], (cin, cin, 3, 3), jnp.float32)
    b = 0.1 * jax.random.normal(ks[5], (cin,), jnp.float32)
    p["cbr2_w"], p["cbr2_b"] = bn_fold(w, b, ks[6], ks[7])

    # Transposed convs: PyTorch ConvTranspose2d layout (Cin, Cout, 3, 3).
    p["ct_w"] = 0.1 * jax.random.normal(ks[8], (cin, cout, 3, 3), jnp.float32)
    p["ct_b"] = 0.1 * jax.random.normal(ks[9], (cout,), jnp.float32)
    p["up_w"] = 0.1 * jax.random.normal(ks[10], (cin, cout, 3, 3), jnp.float32)
    p["up_b"] = 0.1 * jax.random.normal(ks[11], (cout,), jnp.float32)

    # GA(out_channel, out_channel)
    p["ga_tc1_w"] = 0.1 * jax.random.normal(ks[12], (cout, cout, 3, 3), jnp.float32)  # bias=False
    p["ga_tc2_w"] = 0.1 * jax.random.normal(ks[13], (cout, cout, 3, 3), jnp.float32)
    p["ga_tc2_b"] = 0.1 * jax.random.normal(ks[14], (cout,), jnp.float32)
    p["ga_c1_w"] = 0.1 * jax.random.normal(ks[15], (cout, cout, 1, 1), jnp.float32)
    p["ga_c1_b"] = 0.1 * jax.random.normal(ks[16], (cout,), jnp.float32)
    p["ga_c2_w"] = 0.1 * jax.random.normal(ks[17], (1, cout, 1, 1), jnp.float32)
    p["ga_c2_b"] = 0.1 * jax.random.normal(ks[18], (1,), jnp.float32)
    return p


if __name__ == "__main__":
    # N=4 exercises both lane-batching (NB=2 images per step) and a 2-step
    # "parallel" grid (both TensorCores on v7x).
    N, CIN, COUT, H = 4, 8, 4, 8
    key = jax.random.PRNGKey(0)
    kx, kg, kp = jax.random.split(key, 3)
    x = jax.random.normal(kx, (N, CIN, H, H), jnp.float32)   # decoder feature
    g = jax.random.normal(kg, (N, COUT, H, H), jnp.float32)  # gating feature
    params = init_params(kp, CIN, COUT)

    out = jax.block_until_ready(jax.jit(upblock_forward)(x, g, params))
    assert out.shape == (N, COUT, 2 * H + 1, 2 * H + 1), out.shape
    assert bool(jnp.all(jnp.isfinite(out)))

    ref = upblock_reference(x, g, params)
    err = float(jnp.max(jnp.abs(out - ref)))
    assert err < 5e-3, f"kernel/ref mismatch: max abs err = {err}"
    print("KERNEL_OK")
</pallas_src>

<mosaic_0001>
module attributes {stable_mosaic.version = 11 : i64} {
  func.func @kernel(%arg0: i32, %arg1: memref<1x8x256xf32, #tpu.memory_space<vmem>>, %arg2: memref<1x4x256xf32, #tpu.memory_space<vmem>>, %arg3: memref<1x256xf32, #tpu.memory_space<vmem>>, %arg4: memref<16x72xf32, #tpu.memory_space<vmem>>, %arg5: memref<144x12xf32, #tpu.memory_space<vmem>>, %arg6: memref<8x12xf32, #tpu.memory_space<vmem>>, %arg7: memref<1x4x1024xf32, #tpu.memory_space<vmem>>) attributes {dimension_semantics = [#tpu.dimension_semantics<parallel>], iteration_bounds = array<i64: 2>, scalar_prefetch = 0 : i64, scratch_operands = 0 : i64, tpu.core_type = #tpu.core_type<tc>, window_params = [{transform_indices = @transform_0, window_bounds = array<i64: 1, 8, 256>}, {transform_indices = @transform_1, window_bounds = array<i64: 1, 4, 256>}, {pipeline_mode = #tpu.pipeline_mode<synchronous>, transform_indices = @transform_2, window_bounds = array<i64: 1, 256>}, {pipeline_mode = #tpu.pipeline_mode<synchronous>, transform_indices = @transform_3, window_bounds = array<i64: 16, 72>}, {pipeline_mode = #tpu.pipeline_mode<synchronous>, transform_indices = @transform_4, window_bounds = array<i64: 144, 12>}, {pipeline_mode = #tpu.pipeline_mode<synchronous>, transform_indices = @transform_5, window_bounds = array<i64: 8, 12>}, {transform_indices = @transform_6, window_bounds = array<i64: 1, 4, 1024>}]} {
    %c0 = arith.constant 0 : index
    %c0_0 = arith.constant 0 : index
    %0 = vector.load %arg3[%c0, %c0_0] : memref<1x256xf32, #tpu.memory_space<vmem>>, vector<1x256xf32>
    %c0_1 = arith.constant 0 : index
    %c0_2 = arith.constant 0 : index
    %1 = vector.load %arg6[%c0_1, %c0_2] : memref<8x12xf32, #tpu.memory_space<vmem>>, vector<8x12xf32>
    %c0_3 = arith.constant 0 : index
    %c0_4 = arith.constant 0 : index
    %2 = vector.load %arg4[%c0_3, %c0_4] : memref<16x72xf32, #tpu.memory_space<vmem>>, vector<16x72xf32>
    %3 = vector.extract_strided_slice %1 {offsets = [0, 0], sizes = [8, 1], strides = [1, 1]} : vector<8x12xf32> to vector<8x1xf32>
    %4 = vector.extract_strided_slice %1 {offsets = [0, 1], sizes = [8, 1], strides = [1, 1]} : vector<8x12xf32> to vector<8x1xf32>
    %5 = vector.extract_strided_slice %1 {offsets = [0, 2], sizes = [4, 1], strides = [1, 1]} : vector<8x12xf32> to vector<4x1xf32>
    %6 = vector.extract_strided_slice %1 {offsets = [0, 3], sizes = [4, 1], strides = [1, 1]} : vector<8x12xf32> to vector<4x1xf32>
    %7 = vector.extract_strided_slice %1 {offsets = [0, 4], sizes = [4, 1], strides = [1, 1]} : vector<8x12xf32> to vector<4x1xf32>
    %8 = vector.extract_strided_slice %1 {offsets = [0, 5], sizes = [4, 1], strides = [1, 1]} : vector<8x12xf32> to vector<4x1xf32>
    %9 = vector.extract_strided_slice %1 {offsets = [0, 6], sizes = [4, 1], strides = [1, 1]} : vector<8x12xf32> to vector<4x1xf32>
    %10 = vector.extract_strided_slice %1 {offsets = [0, 7], sizes = [1, 1], strides = [1, 1]} : vector<8x12xf32> to vector<1x1xf32>
    %11 = vector.extract_strided_slice %1 {offsets = [0, 8], sizes = [4, 4], strides = [1, 1]} : vector<8x12xf32> to vector<4x4xf32>
    %c0_5 = arith.constant 0 : index
    %c0_6 = arith.constant 0 : index
    %c0_7 = arith.constant 0 : index
    %12 = vector.load %arg1[%c0_5, %c0_6, %c0_7] : memref<1x8x256xf32, #tpu.memory_space<vmem>>, vector<1x8x256xf32>
    %13 = vector.shape_cast %12 : vector<1x8x256xf32> to vector<8x256xf32>
    %14 = vector.extract_strided_slice %2 {offsets = [0, 0], sizes = [8, 72], strides = [1, 1]} : vector<16x72xf32> to vector<8x72xf32>
    %cst = arith.constant 0.000000e+00 : f32
    %15 = vector.broadcast %cst : f32 to vector<8x11xf32>
    %16 = vector.extract_strided_slice %13 {offsets = [0, 0], sizes = [8, 245], strides = [1, 1]} : vector<8x256xf32> to vector<8x245xf32>
    %17 = tpu.concatenate %15, %16 in 1 : vector<8x11xf32>, vector<8x245xf32> -> vector<8x256xf32>
    %cst_8 = arith.constant 0.000000e+00 : f32
    %18 = vector.broadcast %cst_8 : f32 to vector<8x10xf32>
    %19 = vector.extract_strided_slice %13 {offsets = [0, 0], sizes = [8, 246], strides = [1, 1]} : vector<8x256xf32> to vector<8x246xf32>
    %20 = tpu.concatenate %18, %19 in 1 : vector<8x10xf32>, vector<8x246xf32> -> vector<8x256xf32>
    %cst_9 = arith.constant 0.000000e+00 : f32
    %21 = vector.broadcast %cst_9 : f32 to vector<8x9xf32>
    %22 = vector.extract_strided_slice %13 {offsets = [0, 0], sizes = [8, 247], strides = [1, 1]} : vector<8x256xf32> to vector<8x247xf32>
    %23 = tpu.concatenate %21, %22 in 1 : vector<8x9xf32>, vector<8x247xf32> -> vector<8x256xf32>
    %cst_10 = arith.constant 0.000000e+00 : f32
    %24 = vector.broadcast %cst_10 : f32 to vector<8x1xf32>
    %25 = vector.extract_strided_slice %13 {offsets = [0, 0], sizes = [8, 255], strides = [1, 1]} : vector<8x256xf32> to vector<8x255xf32>
    %26 = tpu.concatenate %24, %25 in 1 : vector<8x1xf32>, vector<8x255xf32> -> vector<8x256xf32>
    %cst_11 = arith.constant 0.000000e+00 : f32
    %27 = vector.broadcast %cst_11 : f32 to vector<8x1xf32>
    %28 = vector.extract_strided_slice %13 {offsets = [0, 1], sizes = [8, 255], strides = [1, 1]} : vector<8x256xf32> to vector<8x255xf32>
    %29 = tpu.concatenate %28, %27 in 1 : vector<8x255xf32>, vector<8x1xf32> -> vector<8x256xf32>
    %cst_12 = arith.constant 0.000000e+00 : f32
    %30 = vector.broadcast %cst_12 : f32 to vector<8x9xf32>
    %31 = vector.extract_strided_slice %13 {offsets = [0, 9], sizes = [8, 247], strides = [1, 1]} : vector<8x256xf32> to vector<8x247xf32>
    %32 = tpu.concatenate %31, %30 in 1 : vector<8x247xf32>, vector<8x9xf32> -> vector<8x256xf32>
    %cst_13 = arith.constant 0.000000e+00 : f32
    %33 = vector.broadcast %cst_13 : f32 to vector<8x10xf32>
    %34 = vector.extract_strided_slice %13 {offsets = [0, 10], sizes = [8, 246], strides = [1, 1]} : vector<8x256xf32> to vector<8x246xf32>
    %35 = tpu.concatenate %34, %33 in 1 : vector<8x246xf32>, vector<8x10xf32> -> vector<8x256xf32>
    %cst_14 = arith.constant 0.000000e+00 : f32
    %36 = vector.broadcast %cst_14 : f32 to vector<8x11xf32>
    %37 = vector.extract_strided_slice %13 {offsets = [0, 11], sizes = [8, 245], strides = [1, 1]} : vector<8x256xf32> to vector<8x245xf32>
    %38 = tpu.concatenate %37, %36 in 1 : vector<8x245xf32>, vector<8x11xf32> -> vector<8x256xf32>
    %39 = tpu.concatenate %17, %20, %23, %26, %13, %29, %32, %35, %38 in 0 : vector<8x256xf32>, vector<8x256xf32>, vector<8x256xf32>, vector<8x256xf32>, vector<8x256xf32>, vector<8x256xf32>, vector<8x256xf32>, vector<8x256xf32>, vector<8x256xf32> -> vector<72x256xf32>
    %cst_15 = arith.constant dense<0.000000e+00> : vector<8x256xf32>
    %40 = tpu.matmul %14, %39, %cst_15 {dimension_numbers = #tpu.dot_dimension_numbers<[1], [0], [0], [1], [0, 0, 1, 1], [], []>} : vector<8x72xf32>, vector<72x256xf32>, vector<8x256xf32> -> vector<8x256xf32>
    %41 = vector.broadcast %3 : vector<8x1xf32> to vector<8x256xf32>
    %42 = arith.addf %40, %41 : vector<8x256xf32>
    %cst_16 = arith.constant 0.000000e+00 : f32
    %43 = vector.broadcast %cst_16 : f32 to vector<8x256xf32>
    %44 = arith.maximumf %42, %43 : vector<8x256xf32>
    %45 = vector.broadcast %0 : vector<1x256xf32> to vector<8x256xf32>
    %46 = arith.mulf %44, %45 : vector<8x256xf32>
    %47 = vector.extract_strided_slice %2 {offsets = [8, 0], sizes = [8, 72], strides = [1, 1]} : vector<16x72xf32> to vector<8x72xf32>
    %cst_17 = arith.constant 0.000000e+00 : f32
    %48 = vector.broadcast %cst_17 : f32 to vector<8x11xf32>
    %49 = vector.extract_strided_slice %46 {offsets = [0, 0], sizes = [8, 245], strides = [1, 1]} : vector<8x256xf32> to vector<8x245xf32>
    %50 = tpu.concatenate %48, %49 in 1 : vector<8x11xf32>, vector<8x245xf32> -> vector<8x256xf32>
    %cst_18 = arith.constant 0.000000e+00 : f32
    %51 = vector.broadcast %cst_18 : f32 to vector<8x10xf32>
    %52 = vector.extract_strided_slice %46 {offsets = [0, 0], sizes = [8, 246], strides = [1, 1]} : vector<8x256xf32> to vector<8x246xf32>
    %53 = tpu.concatenate %51, %52 in 1 : vector<8x10xf32>, vector<8x246xf32> -> vector<8x256xf32>
    %cst_19 = arith.constant 0.000000e+00 : f32
    %54 = vector.broadcast %cst_19 : f32 to vector<8x9xf32>
    %55 = vector.extract_strided_slice %46 {offsets = [0, 0], sizes = [8, 247], strides = [1, 1]} : vector<8x256xf32> to vector<8x247xf32>
    %56 = tpu.concatenate %54, %55 in 1 : vector<8x9xf32>, vector<8x247xf32> -> vector<8x256xf32>
    %cst_20 = arith.constant 0.000000e+00 : f32
    %57 = vector.broadcast %cst_20 : f32 to vector<8x1xf32>
    %58 = vector.extract_strided_slice %46 {offsets = [0, 0], sizes = [8, 255], strides = [1, 1]} : vector<8x256xf32> to vector<8x255xf32>
    %59 = tpu.concatenate %57, %58 in 1 : vector<8x1xf32>, vector<8x255xf32> -> vector<8x256xf32>
    %cst_21 = arith.constant 0.000000e+00 : f32
    %60 = vector.broadcast %cst_21 : f32 to vector<8x1xf32>
    %61 = vector.extract_strided_slice %46 {offsets = [0, 1], sizes = [8, 255], strides = [1, 1]} : vector<8x256xf32> to vector<8x255xf32>
    %62 = tpu.concatenate %61, %60 in 1 : vector<8x255xf32>, vector<8x1xf32> -> vector<8x256xf32>
    %cst_22 = arith.constant 0.000000e+00 : f32
    %63 = vector.broadcast %cst_22 : f32 to vector<8x9xf32>
    %64 = vector.extract_strided_slice %46 {offsets = [0, 9], sizes = [8, 247], strides = [1, 1]} : vector<8x256xf32> to vector<8x247xf32>
    %65 = tpu.concatenate %64, %63 in 1 : vector<8x247xf32>, vector<8x9xf32> -> vector<8x256xf32>
    %cst_23 = arith.constant 0.000000e+00 : f32
    %66 = vector.broadcast %cst_23 : f32 to vector<8x10xf32>
    %67 = vector.extract_strided_slice %46 {offsets = [0, 10], sizes = [8, 246], strides = [1, 1]} : vector<8x256xf32> to vector<8x246xf32>
    %68 = tpu.concatenate %67, %66 in 1 : vector<8x246xf32>, vector<8x10xf32> -> vector<8x256xf32>
    %cst_24 = arith.constant 0.000000e+00 : f32
    %69 = vector.broadcast %cst_24 : f32 to vector<8x11xf32>
    %70 = vector.extract_strided_slice %46 {offsets = [0, 11], sizes = [8, 245], strides = [1, 1]} : vector<8x256xf32> to vector<8x245xf32>
    %71 = tpu.concatenate %70, %69 in 1 : vector<8x245xf32>, vector<8x11xf32> -> vector<8x256xf32>
    %72 = tpu.concatenate %50, %53, %56, %59, %46, %62, %65, %68, %71 in 0 : vector<8x256xf32>, vector<8x256xf32>, vector<8x256xf32>, vector<8x256xf32>, vector<8x256xf32>, vector<8x256xf32>, vector<8x256xf32>, vector<8x256xf32>, vector<8x256xf32> -> vector<72x256xf32>
    %cst_25 = arith.constant dense<0.000000e+00> : vector<8x256xf32>
    %73 = tpu.matmul %47, %72, %cst_25 {dimension_numbers = #tpu.dot_dimension_numbers<[1], [0], [0], [1], [0, 0, 1, 1], [], []>} : vector<8x72xf32>, vector<72x256xf32>, vector<8x256xf32> -> vector<8x256xf32>
    %74 = vector.broadcast %4 : vector<8x1xf32> to vector<8x256xf32>
    %75 = arith.addf %73, %74 : vector<8x256xf32>
    %cst_26 = arith.constant 0.000000e+00 : f32
    %76 = vector.broadcast %cst_26 : f32 to vector<8x256xf32>
    %77 = arith.maximumf %75, %76 : vector<8x256xf32>
    %78 = vector.broadcast %0 : vector<1x256xf32> to vector<8x256xf32>
    %79 = arith.mulf %77, %78 : vector<8x256xf32>
    %c0_27 = arith.constant 0 : index
    %c0_28 = arith.constant 0 : index
    %c0_29 = arith.constant 0 : index
    %80 = vector.load %arg2[%c0_27, %c0_28, %c0_29] : memref<1x4x256xf32, #tpu.memory_space<vmem>>, vector<1x4x256xf32>
    %81 = vector.shape_cast %80 : vector<1x4x256xf32> to vector<4x256xf32>
    %82 = tpu.concatenate %79, %81 in 0 : vector<8x256xf32>, vector<4x256xf32> -> vector<12x256xf32>
    %c0_30 = arith.constant 0 : index
    %c0_31 = arith.constant 0 : index
    %83 = vector.load %arg5[%c0_30, %c0_31] : memref<144x12xf32, #tpu.memory_space<vmem>>, vector<144x12xf32>
    %cst_32 = arith.constant dense<0.000000e+00> : vector<144x256xf32>
    %84 = tpu.matmul %83, %82, %cst_32 {dimension_numbers = #tpu.dot_dimension_numbers<[1], [0], [0], [1], [0, 0, 1, 1], [], []>} : vector<144x12xf32>, vector<12x256xf32>, vector<144x256xf32> -> vector<144x256xf32>
    %85 = vector.extract_strided_slice %84 {offsets = [0, 0], sizes = [16, 256], strides = [1, 1]} : vector<144x256xf32> to vector<16x256xf32>
    %86 = vector.extract_strided_slice %84 {offsets = [32, 0], sizes = [16, 256], strides = [1, 1]} : vector<144x256xf32> to vector<16x256xf32>
    %cst_33 = arith.constant 0.000000e+00 : f32
    %87 = vector.broadcast %cst_33 : f32 to vector<16x1xf32>
    %88 = vector.extract_strided_slice %86 {offsets = [0, 0], sizes = [16, 255], strides = [1, 1]} : vector<16x256xf32> to vector<16x255xf32>
    %89 = tpu.concatenate %87, %88 in 1 : vector<16x1xf32>, vector<16x255xf32> -> vector<16x256xf32>
    %90 = arith.addf %85, %89 : vector<16x256xf32>
    %91 = vector.extract_strided_slice %84 {offsets = [96, 0], sizes = [16, 256], strides = [1, 1]} : vector<144x256xf32> to vector<16x256xf32>
    %cst_34 = arith.constant 0.000000e+00 : f32
    %92 = vector.broadcast %cst_34 : f32 to vector<16x10xf32>
    %93 = vector.extract_strided_slice %91 {offsets = [0, 0], sizes = [16, 246], strides = [1, 1]} : vector<16x256xf32> to vector<16x246xf32>
    %94 = tpu.concatenate %92, %93 in 1 : vector<16x10xf32>, vector<16x246xf32> -> vector<16x256xf32>
    %95 = arith.addf %90, %94 : vector<16x256xf32>
    %96 = vector.extract_strided_slice %84 {offsets = [128, 0], sizes = [16, 256], strides = [1, 1]} : vector<144x256xf32> to vector<16x256xf32>
    %cst_35 = arith.constant 0.000000e+00 : f32
    %97 = vector.broadcast %cst_35 : f32 to vector<16x11xf32>
    %98 = vector.extract_strided_slice %96 {offsets = [0, 0], sizes = [16, 245], strides = [1, 1]} : vector<16x256xf32> to vector<16x245xf32>
    %99 = tpu.concatenate %97, %98 in 1 : vector<16x11xf32>, vector<16x245xf32> -> vector<16x256xf32>
    %100 = arith.addf %95, %99 : vector<16x256xf32>
    %101 = vector.extract_strided_slice %100 {offsets = [0, 0], sizes = [4, 256], strides = [1, 1]} : vector<16x256xf32> to vector<4x256xf32>
    %102 = vector.broadcast %5 : vector<4x1xf32> to vector<4x256xf32>
    %103 = arith.addf %101, %102 : vector<4x256xf32>
    %104 = vector.extract_strided_slice %100 {offsets = [4, 0], sizes = [4, 256], strides = [1, 1]} : vector<16x256xf32> to vector<4x256xf32>
    %105 = vector.broadcast %6 : vector<4x1xf32> to vector<4x256xf32>
    %106 = arith.addf %104, %105 : vector<4x256xf32>
    %107 = vector.extract_strided_slice %100 {offsets = [8, 0], sizes = [4, 256], strides = [1, 1]} : vector<16x256xf32> to vector<4x256xf32>
    %108 = vector.extract_strided_slice %100 {offsets = [12, 0], sizes = [4, 256], strides = [1, 1]} : vector<16x256xf32> to vector<4x256xf32>
    %109 = vector.broadcast %7 : vector<4x1xf32> to vector<4x256xf32>
    %110 = arith.addf %108, %109 : vector<4x256xf32>
    %111 = arith.addf %107, %103 : vector<4x256xf32>
    %112 = vector.extract_strided_slice %84 {offsets = [16, 0], sizes = [16, 256], strides = [1, 1]} : vector<144x256xf32> to vector<16x256xf32>
    %113 = vector.extract_strided_slice %84 {offsets = [112, 0], sizes = [16, 256], strides = [1, 1]} : vector<144x256xf32> to vector<16x256xf32>
    %cst_36 = arith.constant 0.000000e+00 : f32
    %114 = vector.broadcast %cst_36 : f32 to vector<16x10xf32>
    %115 = vector.extract_strided_slice %113 {offsets = [0, 0], sizes = [16, 246], strides = [1, 1]} : vector<16x256xf32> to vector<16x246xf32>
    %116 = tpu.concatenate %114, %115 in 1 : vector<16x10xf32>, vector<16x246xf32> -> vector<16x256xf32>
    %117 = arith.addf %112, %116 : vector<16x256xf32>
    %118 = vector.extract_strided_slice %117 {offsets = [0, 0], sizes = [4, 256], strides = [1, 1]} : vector<16x256xf32> to vector<4x256xf32>
    %119 = vector.broadcast %5 : vector<4x1xf32> to vector<4x256xf32>
    %120 = arith.addf %118, %119 : vector<4x256xf32>
    %121 = vector.extract_strided_slice %117 {offsets = [4, 0], sizes = [4, 256], strides = [1, 1]} : vector<16x256xf32> to vector<4x256xf32>
    %122 = vector.broadcast %6 : vector<4x1xf32> to vector<4x256xf32>
    %123 = arith.addf %121, %122 : vector<4x256xf32>
    %124 = vector.extract_strided_slice %117 {offsets = [8, 0], sizes = [4, 256], strides = [1, 1]} : vector<16x256xf32> to vector<4x256xf32>
    %125 = vector.extract_strided_slice %117 {offsets = [12, 0], sizes = [4, 256], strides = [1, 1]} : vector<16x256xf32> to vector<4x256xf32>
    %126 = vector.broadcast %7 : vector<4x1xf32> to vector<4x256xf32>
    %127 = arith.addf %125, %126 : vector<4x256xf32>
    %128 = arith.addf %124, %120 : vector<4x256xf32>
    %129 = vector.extract_strided_slice %84 {offsets = [48, 0], sizes = [16, 256], strides = [1, 1]} : vector<144x256xf32> to vector<16x256xf32>
    %130 = vector.extract_strided_slice %84 {offsets = [80, 0], sizes = [16, 256], strides = [1, 1]} : vector<144x256xf32> to vector<16x256xf32>
    %cst_37 = arith.constant 0.000000e+00 : f32
    %131 = vector.broadcast %cst_37 : f32 to vector<16x1xf32>
    %132 = vector.extract_strided_slice %130 {offsets = [0, 0], sizes = [16, 255], strides = [1, 1]} : vector<16x256xf32> to vector<16x255xf32>
    %133 = tpu.concatenate %131, %132 in 1 : vector<16x1xf32>, vector<16x255xf32> -> vector<16x256xf32>
    %134 = arith.addf %129, %133 : vector<16x256xf32>
    %135 = vector.extract_strided_slice %134 {offsets = [0, 0], sizes = [4, 256], strides = [1, 1]} : vector<16x256xf32> to vector<4x256xf32>
    %136 = vector.broadcast %5 : vector<4x1xf32> to vector<4x256xf32>
    %137 = arith.addf %135, %136 : vector<4x256xf32>
    %138 = vector.extract_strided_slice %134 {offsets = [4, 0], sizes = [4, 256], strides = [1, 1]} : vector<16x256xf32> to vector<4x256xf32>
    %139 = vector.broadcast %6 : vector<4x1xf32> to vector<4x256xf32>
    %140 = arith.addf %138, %139 : vector<4x256xf32>
    %141 = vector.extract_strided_slice %134 {offsets = [8, 0], sizes = [4, 256], strides = [1, 1]} : vector<16x256xf32> to vector<4x256xf32>
    %142 = vector.extract_strided_slice %134 {offsets = [12, 0], sizes = [4, 256], strides = [1, 1]} : vector<16x256xf32> to vector<4x256xf32>
    %143 = vector.broadcast %7 : vector<4x1xf32> to vector<4x256xf32>
    %144 = arith.addf %142, %143 : vector<4x256xf32>
    %145 = arith.addf %141, %137 : vector<4x256xf32>
    %146 = vector.extract_strided_slice %84 {offsets = [64, 0], sizes = [16, 256], strides = [1, 1]} : vector<144x256xf32> to vector<16x256xf32>
    %147 = vector.extract_strided_slice %146 {offsets = [0, 0], sizes = [4, 256], strides = [1, 1]} : vector<16x256xf32> to vector<4x256xf32>
    %148 = vector.broadcast %5 : vector<4x1xf32> to vector<4x256xf32>
    %149 = arith.addf %147, %148 : vector<4x256xf32>
    %150 = vector.extract_strided_slice %146 {offsets = [4, 0], sizes = [4, 256], strides = [1, 1]} : vector<16x256xf32> to vector<4x256xf32>
    %151 = vector.broadcast %6 : vector<4x1xf32> to vector<4x256xf32>
    %152 = arith.addf %150, %151 : vector<4x256xf32>
    %153 = vector.extract_strided_slice %146 {offsets = [8, 0], sizes = [4, 256], strides = [1, 1]} : vector<16x256xf32> to vector<4x256xf32>
    %154 = vector.extract_strided_slice %146 {offsets = [12, 0], sizes = [4, 256], strides = [1, 1]} : vector<16x256xf32> to vector<4x256xf32>
    %155 = vector.broadcast %7 : vector<4x1xf32> to vector<4x256xf32>
    %156 = arith.addf %154, %155 : vector<4x256xf32>
    %157 = arith.addf %153, %149 : vector<4x256xf32>
    %158 = tpu.concatenate %111, %128, %145, %157 in 1 : vector<4x256xf32>, vector<4x256xf32>, vector<4x256xf32>, vector<4x256xf32> -> vector<4x1024xf32>
    %159 = tpu.concatenate %106, %123, %140, %152 in 1 : vector<4x256xf32>, vector<4x256xf32>, vector<4x256xf32>, vector<4x256xf32> -> vector<4x1024xf32>
    %160 = tpu.concatenate %110, %127, %144, %156 in 1 : vector<4x256xf32>, vector<4x256xf32>, vector<4x256xf32>, vector<4x256xf32> -> vector<4x1024xf32>
    %cst_38 = arith.constant dense<0.000000e+00> : vector<4x1024xf32>
    %161 = tpu.matmul %11, %158, %cst_38 {dimension_numbers = #tpu.dot_dimension_numbers<[1], [0], [0], [1], [0, 0, 1, 1], [], []>} : vector<4x4xf32>, vector<4x1024xf32>, vector<4x1024xf32> -> vector<4x1024xf32>
    %162 = vector.broadcast %8 : vector<4x1xf32> to vector<4x1024xf32>
    %163 = arith.addf %161, %162 : vector<4x1024xf32>
    %cst_39 = arith.constant 0.000000e+00 : f32
    %164 = vector.broadcast %cst_39 : f32 to vector<4x1024xf32>
    %165 = arith.maximumf %163, %164 : vector<4x1024xf32>
    %166 = vector.broadcast %9 : vector<4x1xf32> to vector<4x1024xf32>
    %167 = arith.mulf %165, %166 : vector<4x1024xf32>
    %cst_40 = arith.constant dense<0.000000e+00> : vector<1024xf32>
    %168 = vector.multi_reduction <add>, %167, %cst_40 [0] : vector<4x1024xf32> to vector<1024xf32>
    %169 = vector.shape_cast %168 : vector<1024xf32> to vector<1x1024xf32>
    %170 = vector.broadcast %10 : vector<1x1xf32> to vector<1x1024xf32>
    %171 = arith.addf %169, %170 : vector<1x1024xf32>
    %cst_41 = arith.constant 0.000000e+00 : f32
    %172 = vector.broadcast %cst_41 : f32 to vector<1x1024xf32>
    %173 = arith.subf %172, %171 : vector<1x1024xf32>
    %174 = math.exp %173 : vector<1x1024xf32>
    %cst_42 = arith.constant 1.000000e+00 : f32
    %175 = vector.broadcast %cst_42 : f32 to vector<1x1024xf32>
    %176 = arith.addf %175, %174 : vector<1x1024xf32>
    %cst_43 = arith.constant 1.000000e+00 : f32
    %177 = vector.broadcast %cst_43 : f32 to vector<1x1024xf32>
    %178 = arith.divf %177, %176 : vector<1x1024xf32>
    %179 = vector.broadcast %178 : vector<1x1024xf32> to vector<4x1024xf32>
    %180 = arith.mulf %179, %160 : vector<4x1024xf32>
    %181 = arith.addf %159, %180 : vector<4x1024xf32>
    %c0_44 = arith.constant 0 : index
    %c0_45 = arith.constant 0 : index
    %c0_46 = arith.constant 0 : index
    %182 = vector.load %arg7[%c0_44, %c0_45, %c0_46] : memref<1x4x1024xf32, #tpu.memory_space<vmem>>, vector<1x4x1024xf32>
    %183 = vector.shape_cast %182 : vector<1x4x1024xf32> to vector<4x1024xf32>
    %184 = vector.shape_cast %181 : vector<4x1024xf32> to vector<1x4x1024xf32>
    tpu.vector_store %arg7[%c0_44, %c0_45, %c0_46], %184 {strides = array<i32>} : memref<1x4x1024xf32, #tpu.memory_space<vmem>>, vector<1x4x1024xf32>,
    return
  }
  func.func @transform_0(%arg0: i32) -> (i32, i32, i32) {
    %c0_i32 = arith.constant 0 : i32
    %c0_i32_0 = arith.constant 0 : i32
    %c0_i32_1 = arith.constant 0 : i32
    return %arg0, %c0_i32, %c0_i32_0 : i32, i32, i32
  }
  func.func @transform_1(%arg0: i32) -> (i32, i32, i32) {
    %c0_i32 = arith.constant 0 : i32
    %c0_i32_0 = arith.constant 0 : i32
    %c0_i32_1 = arith.constant 0 : i32
    return %arg0, %c0_i32, %c0_i32_0 : i32, i32, i32
  }
  func.func @transform_2(%arg0: i32) -> (i32, i32) {
    %c0_i32 = arith.constant 0 : i32
    %c0_i32_0 = arith.constant 0 : i32
    %c0_i32_1 = arith.constant 0 : i32
    return %c0_i32, %c0_i32_0 : i32, i32
  }
  func.func @transform_3(%arg0: i32) -> (i32, i32) {
    %c0_i32 = arith.constant 0 : i32
    %c0_i32_0 = arith.constant 0 : i32
    %c0_i32_1 = arith.constant 0 : i32
    return %c0_i32, %c0_i32_0 : i32, i32
  }
  func.func @transform_4(%arg0: i32) -> (i32, i32) {
    %c0_i32 = arith.constant 0 : i32
    %c0_i32_0 = arith.constant 0 : i32
    %c0_i32_1 = arith.constant 0 : i32
    return %c0_i32, %c0_i32_0 : i32, i32
  }
  func.func @transform_5(%arg0: i32) -> (i32, i32) {
    %c0_i32 = arith.constant 0 : i32
    %c0_i32_0 = arith.constant 0 : i32
    %c0_i32_1 = arith.constant 0 : i32
    return %c0_i32, %c0_i32_0 : i32, i32
  }
  func.func @transform_6(%arg0: i32) -> (i32, i32, i32) {
    %c0_i32 = arith.constant 0 : i32
    %c0_i32_0 = arith.constant 0 : i32
    %c0_i32_1 = arith.constant 0 : i32
    return %arg0, %c0_i32, %c0_i32_0 : i32, i32, i32
  }
}

</mosaic_0001>

<llo_original>
// kernel: tile.8
$region0: #{tile.8}
  #allocation0 [shape = 's32[1]{0}', space=sflag, size = 0x4, scoped, tag = 'scoped memory for tile.8']
  %s0 = inlined_call_operand.vmem [shape: f32[128], index: 0, kind: input, shape index: {}]
  %s1 = inlined_call_operand.vmem [shape: f32[2,128], index: 1, kind: output, shape index: {}]
  // Predicated region
  $region2: #{tile.8} parent=0 // pred_check
    _
  $region3: #{tile.8} parent=0 // pred_check_branch
    %3 = sbr.rel (0) target = $region5
  $region4: #{tile.8} parent=0 // pred_region
    _
  $region5: #{tile.8} parent=0 // pred_fallthru
    _
  %v4 = vld [vmem:[%s0] ss:$0 sm:$0xff]
  %5 = vst [vmem:[%s1] sm:$0x3] %v4

// kernel: upblock_forward.1
$region0: #{upblock_forward.1}
  #allocation0 [shape = 'u32[]', space=smem, size = 0x4, offset = 0x4, fixed_abs, tag = 'smem constant byte address 0x4 - core index']
  #allocation1 [shape = 'u32[144,128]{1,0:T(1,128)}', space=vmem, size = 0x12000, scoped, tag = 'internal scratch']
  %s0 = inlined_call_operand.vmem [shape: f32[2,8,256], index: 0, kind: input, shape index: {}]
  %s1 = inlined_call_operand.vmem [shape: f32[2,4,256], index: 1, kind: input, shape index: {}]
  %s2 = inlined_call_operand.vmem [shape: f32[1,256], index: 2, kind: input, shape index: {}]
  %s3 = inlined_call_operand.vmem [shape: f32[16,72], index: 3, kind: input, shape index: {}]
  %s4 = inlined_call_operand.vmem [shape: f32[144,12], index: 4, kind: input, shape index: {}]
  %s5 = inlined_call_operand.vmem [shape: f32[8,12], index: 5, kind: input, shape index: {}]
  %s6 = inlined_call_operand.vmem [shape: f32[2,4,1024], index: 6, kind: output, shape index: {}]
  %s7 = sld [smem:[#allocation0]]
  $region57: #{upblock_forward.1} parent=0
    _
  %s9 = ssub.s32 1, %s7
  %s10 = scalar_select 0, %s9, %s7
  loop: start=0, step=1, limit=4
  $region2: #{upblock_forward.1} parent=0 // loop_pre_header
    _
  $region3: #{upblock_forward.1} parent=0 // loop_header
    %s12 = sphi 0, %s16
    %p13 = scmp.ge.s32.totalorder %s12, 4
    %s22 = sphi 0, %s24
    %s25 = sphi 0, %s22
    %s26 = sphi 0, %s25
    %s42 = sphi 0, %s26
    %s48 = sphi 0, %s50
    %s51 = sphi 0, %s48
    %s52 = sphi 0, %s51
    %s68 = sphi 0, %s52
    %s72 = sphi 0, %s72
    %s74 = sphi 0, %s72
    %s75 = sphi 0, %s74
    %s89 = sphi 0, %s75
    %s93 = sphi 0, %s93
    %s95 = sphi 0, %s93
    %s96 = sphi 0, %s95
    %s110 = sphi 0, %s96
    %s114 = sphi 0, %s114
    %s116 = sphi 0, %s114
    %s117 = sphi 0, %s116
    %s131 = sphi 0, %s117
    %s135 = sphi 0, %s135
    %s137 = sphi 0, %s135
    %s138 = sphi 0, %s137
    %s152 = sphi 0, %s138
    %s158 = sphi 0, %s160
    %s161 = sphi 0, %s158
    %s162 = sphi 0, %s161
    %s178 = sphi 0, %s162
  $region4: #{upblock_forward.1} parent=0 // loop_header_branch
    %15 = sbr.rel (%p13) target = $region8
  $region5: #{upblock_forward.1} parent=0 // loop_body
    %s17 = ssub.s32 %s12, 1
    %s18 = ssub.s32 %s12, 2
    %s19 = sadd.s32 %s12, 1
    %s20 = ssub.s32 %s12, %s19
    %p21 = scmp.eq.s32.totalorder %s20, 0
    %s23 = sadd.s32 %s22, 1
    %s24 = scalar_select %p21, %s22, %s23
    %p27 = pneg %p21
    %p28 = scmp.eq.s32.totalorder %s12, 1
    %p29 = por %p27, %p28
    %p30 = scmp.ne.s32.totalorder %s22, %s25
    %p31 = scmp.eq.s32.totalorder %s12, 0
    %p32 = por %p30, %p31
    %p33 = scmp.ne.s32.totalorder %s22, %s25
    %p34 = scmp.eq.s32.totalorder %s17, 1
    %p35 = por %p33, %p34
    %p36 = scmp.ne.s32.totalorder %s25, %s26
    %p37 = scmp.eq.s32.totalorder %s17, 0
    %p38 = por %p36, %p37
    %p39 = scmp.ne.s32.totalorder %s25, %s26
    %p40 = scmp.eq.s32.totalorder %s18, 1
    %p41 = por %p39, %p40
    %p43 = scmp.ne.s32.totalorder %s26, %s42
    %p44 = scmp.eq.s32.totalorder %s18, 0
    %p45 = por %p43, %p44
    %s46 = ssub.s32 %s12, %s19
    %p47 = scmp.eq.s32.totalorder %s46, 0
    %s49 = sadd.s32 %s48, 1
    %s50 = scalar_select %p47, %s48, %s49
    %p53 = pneg %p47
    %p54 = scmp.eq.s32.totalorder %s12, 1
    %p55 = por %p53, %p54
    %p56 = scmp.ne.s32.totalorder %s48, %s51
    %p57 = scmp.eq.s32.totalorder %s12, 0
    %p58 = por %p56, %p57
    %p59 = scmp.ne.s32.totalorder %s48, %s51
    %p60 = scmp.eq.s32.totalorder %s17, 1
    %p61 = por %p59, %p60
    %p62 = scmp.ne.s32.totalorder %s51, %s52
    %p63 = scmp.eq.s32.totalorder %s17, 0
    %p64 = por %p62, %p63
    %p65 = scmp.ne.s32.totalorder %s51, %s52
    %p66 = scmp.eq.s32.totalorder %s18, 1
    %p67 = por %p65, %p66
    %p69 = scmp.ne.s32.totalorder %s52, %s68
    %p70 = scmp.eq.s32.totalorder %s18, 0
    %p71 = por %p69, %p70
    %s73 = sadd.s32 %s72, 1
    %p76 = scmp.eq.s32.totalorder %s12, 1
    %p77 = scmp.ne.s32.totalorder %s72, %s74
    %p78 = scmp.eq.s32.totalorder %s12, 0
    %p79 = por %p77, %p78
    %p80 = scmp.ne.s32.totalorder %s72, %s74
    %p81 = scmp.eq.s32.totalorder %s17, 1
    %p82 = por %p80, %p81
    %p83 = scmp.ne.s32.totalorder %s74, %s75
    %p84 = scmp.eq.s32.totalorder %s17, 0
    %p85 = por %p83, %p84
    %p86 = scmp.ne.s32.totalorder %s74, %s75
    %p87 = scmp.eq.s32.totalorder %s18, 1
    %p88 = por %p86, %p87
    %p90 = scmp.ne.s32.totalorder %s75, %s89
    %p91 = scmp.eq.s32.totalorder %s18, 0
    %p92 = por %p90, %p91
    %s94 = sadd.s32 %s93, 1
    %p97 = scmp.eq.s32.totalorder %s12, 1
    %p98 = scmp.ne.s32.totalorder %s93, %s95
    %p99 = scmp.eq.s32.totalorder %s12, 0
    %p100 = por %p98, %p99
    %p101 = scmp.ne.s32.totalorder %s93, %s95
    %p102 = scmp.eq.s32.totalorder %s17, 1
    %p103 = por %p101, %p102
    %p104 = scmp.ne.s32.totalorder %s95, %s96
    %p105 = scmp.eq.s32.totalorder %s17, 0
    %p106 = por %p104, %p105
    %p107 = scmp.ne.s32.totalorder %s95, %s96
    %p108 = scmp.eq.s32.totalorder %s18, 1
    %p109 = por %p107, %p108
    %p111 = scmp.ne.s32.totalorder %s96, %s110
    %p112 = scmp.eq.s32.totalorder %s18, 0
    %p113 = por %p111, %p112
    %s115 = sadd.s32 %s114, 1
    %p118 = scmp.eq.s32.totalorder %s12, 1
    %p119 = scmp.ne.s32.totalorder %s114, %s116
    %p120 = scmp.eq.s32.totalorder %s12, 0
    %p121 = por %p119, %p120
    %p122 = scmp.ne.s32.totalorder %s114, %s116
    %p123 = scmp.eq.s32.totalorder %s17, 1
    %p124 = por %p122, %p123
    %p125 = scmp.ne.s32.totalorder %s116, %s117
    %p126 = scmp.eq.s32.totalorder %s17, 0
    %p127 = por %p125, %p126
    %p128 = scmp.ne.s32.totalorder %s116, %s117
    %p129 = scmp.eq.s32.totalorder %s18, 1
    %p130 = por %p128, %p129
    %p132 = scmp.ne.s32.totalorder %s117, %s131
    %p133 = scmp.eq.s32.totalorder %s18, 0
    %p134 = por %p132, %p133
    %s136 = sadd.s32 %s135, 1
    %p139 = scmp.eq.s32.totalorder %s12, 1
    %p140 = scmp.ne.s32.totalorder %s135, %s137
    %p141 = scmp.eq.s32.totalorder %s12, 0
    %p142 = por %p140, %p141
    %p143 = scmp.ne.s32.totalorder %s135, %s137
    %p144 = scmp.eq.s32.totalorder %s17, 1
    %p145 = por %p143, %p144
    %p146 = scmp.ne.s32.totalorder %s137, %s138
    %p147 = scmp.eq.s32.totalorder %s17, 0
    %p148 = por %p146, %p147
    %p149 = scmp.ne.s32.totalorder %s137, %s138
    %p150 = scmp.eq.s32.totalorder %s18, 1
    %p151 = por %p149, %p150
    %p153 = scmp.ne.s32.totalorder %s138, %s152
    %p154 = scmp.eq.s32.totalorder %s18, 0
    %p155 = por %p153, %p154
    %s156 = ssub.s32 %s12, %s19
    %p157 = scmp.eq.s32.totalorder %s156, 0
    %s159 = sadd.s32 %s158, 1
    %s160 = scalar_select %p157, %s158, %s159
    %p163 = pneg %p157
    %p164 = scmp.eq.s32.totalorder %s12, 1
    %p165 = por %p163, %p164
    %p166 = scmp.ne.s32.totalorder %s158, %s161
    %p167 = scmp.eq.s32.totalorder %s12, 0
    %p168 = por %p166, %p167
    %p169 = scmp.ne.s32.totalorder %s158, %s161
    %p170 = scmp.eq.s32.totalorder %s17, 1
    %p171 = por %p169, %p170
    %p172 = scmp.ne.s32.totalorder %s161, %s162
    %p173 = scmp.eq.s32.totalorder %s17, 0
    %p174 = por %p172, %p173
    %p175 = scmp.ne.s32.totalorder %s161, %s162
    %p176 = scmp.eq.s32.totalorder %s18, 1
    %p177 = por %p175, %p176
    %p179 = scmp.ne.s32.totalorder %s162, %s178
    %p180 = scmp.eq.s32.totalorder %s18, 0
    %p181 = por %p179, %p180
    %p182 = scmp.le.s32.totalorder 1, %s12
    %p183 = scmp.lt.s32.totalorder %s12, 3
    %p184 = pnand %p182, %p183
    %p185 = pneg %p184
    // Predicated region
    $region9: #{upblock_forward.1} parent=5 // pred_check
      _
    $region10: #{upblock_forward.1} parent=5 // pred_check_branch
      %187 = sbr.rel (%p184) target = $region12
    $region11: #{upblock_forward.1} parent=5 // pred_region
      %s188 = ssub.s32 %s12, 1
      // Predicated region
      $region13: #{upblock_forward.1} parent=11 // pred_check
        %p189 = pneg %p85
      $region14: #{upblock_forward.1} parent=11 // pred_check_branch
        %191 = sbr.rel (%p189) target = $region16
      $region15: #{upblock_forward.1} parent=11 // pred_region
        _
      $region16: #{upblock_forward.1} parent=11 // pred_fallthru
        _
      // Predicated region
      $region17: #{upblock_forward.1} parent=11 // pred_check
        %p192 = pneg %p106
      $region18: #{upblock_forward.1} parent=11 // pred_check_branch
        %194 = sbr.rel (%p192) target = $region20
      $region19: #{upblock_forward.1} parent=11 // pred_region
        _
      $region20: #{upblock_forward.1} parent=11 // pred_fallthru
        _
      // Predicated region
      $region21: #{upblock_forward.1} parent=11 // pred_check
        %p195 = pneg %p127
      $region22: #{upblock_forward.1} parent=11 // pred_check_branch
        %197 = sbr.rel (%p195) target = $region24
      $region23: #{upblock_forward.1} parent=11 // pred_region
        _
      $region24: #{upblock_forward.1} parent=11 // pred_fallthru
        _
      // Predicated region
      $region25: #{upblock_forward.1} parent=11 // pred_check
        %p198 = pneg %p148
      $region26: #{upblock_forward.1} parent=11 // pred_check_branch
        %200 = sbr.rel (%p198) target = $region28
      $region27: #{upblock_forward.1} parent=11 // pred_region
        _
      $region28: #{upblock_forward.1} parent=11 // pred_fallthru
        _
    $region12: #{upblock_forward.1} parent=5 // pred_fallthru
      _
    %p201 = scmp.lt.s32.totalorder %s12, 2
    // Predicated region
    $region29: #{upblock_forward.1} parent=5 // pred_check
      %p202 = pneg %p201
    $region30: #{upblock_forward.1} parent=5 // pred_check_branch
      %204 = sbr.rel (%p202) target = $region32
    $region31: #{upblock_forward.1} parent=5 // pred_region
      // Predicated region
      $region33: #{upblock_forward.1} parent=31 // pred_check
        %p205 = pneg %p32
      $region34: #{upblock_forward.1} parent=31 // pred_check_branch
        %207 = sbr.rel (%p205) target = $region36
      $region35: #{upblock_forward.1} parent=31 // pred_region
        %p208 = scmp.lt.s32.totalorder %s12, 1
        %s209 = scalar_select %p208, %s12, 1
        %s210 = smul.addr %s209, 2
        %s211 = smul.addr %s210, 8
        %s212 = scalar_lea.vmem %s0, %s211
      $region36: #{upblock_forward.1} parent=31 // pred_fallthru
        _
      // Predicated region
      $region37: #{upblock_forward.1} parent=31 // pred_check
        %p213 = pneg %p58
      $region38: #{upblock_forward.1} parent=31 // pred_check_branch
        %215 = sbr.rel (%p213) target = $region40
      $region39: #{upblock_forward.1} parent=31 // pred_region
        %p216 = scmp.lt.s32.totalorder %s12, 1
        %s217 = scalar_select %p216, %s12, 1
        %s218 = smul.addr %s217, 2
        %s219 = smul.addr %s218, 4
        %s220 = scalar_lea.vmem %s1, %s219
      $region40: #{upblock_forward.1} parent=31 // pred_fallthru
        _
    $region32: #{upblock_forward.1} parent=5 // pred_fallthru
      _
    %p221 = scmp.le.s32.totalorder 1, %s12
    %p222 = scmp.lt.s32.totalorder %s12, 3
    %p223 = pnand %p221, %p222
    %p224 = pneg %p223
    // Predicated region
    $region41: #{upblock_forward.1} parent=5 // pred_check
      _
    $region42: #{upblock_forward.1} parent=5 // pred_check_branch
      %226 = sbr.rel (%p223) target = $region44
    $region43: #{upblock_forward.1} parent=5 // pred_region
      %s227 = ssub.s32 %s12, 1
      %p228 = scmp.lt.s32.totalorder %s17, 1
      %s229 = scalar_select %p228, %s17, 1
      %s230 = smul.addr %s229, 2
      %s231 = smul.addr %s230, 8
      %s232 = scalar_lea.vmem %s0, %s231
      %p233 = pneg %p38
      %p234 = pneg %p35
      %p235 = scmp.lt.s32.totalorder %s17, 1
      %s236 = scalar_select %p235, %s17, 1
      %s237 = smul.addr %s236, 2
      %s238 = smul.addr %s237, 4
      %s239 = scalar_lea.vmem %s1, %s238
      %p240 = pneg %p64
      %p241 = pneg %p61
      %p242 = pneg %p85
      %p243 = pneg %p82
      %p244 = pneg %p106
      %p245 = pneg %p103
      %p246 = pneg %p127
      %p247 = pneg %p124
      %p248 = pneg %p148
      %p249 = pneg %p145
      %p250 = pneg %p174
      %p251 = pneg %p171
      %p252 = scmp.lt.s32.totalorder %s17, 1
      %s253 = scalar_select %p252, %s17, 1
      %s254 = smul.addr %s253, 8
      %s255 = smul.addr %s254, 4
      %s256 = scalar_lea.vmem %s6, %s255
      %p257 = scmp.lt.s32.totalorder %s17, 1
      %s258 = scalar_select %p257, %s17, 1
      %s259 = smul.addr %s258, 2
      %s260 = smul.addr %s259, 8
      %s261 = scalar_lea.vmem %s0, %s260
      %p262 = scmp.lt.s32.totalorder %s17, 1
      %s263 = scalar_select %p262, %s17, 1
      %s264 = smul.addr %s263, 2
      %s265 = smul.addr %s264, 4
      %s266 = scalar_lea.vmem %s1, %s265
      %p267 = scmp.lt.s32.totalorder %s17, 1
      %s268 = scalar_select %p267, %s17, 1
      %s269 = smul.addr %s268, 8
      %s270 = smul.addr %s269, 4
      %s271 = scalar_lea.vmem %s6, %s270
      %v272 = vld [vmem:[%s2] sm:$0x3]
      %v273 = vld [vmem:[%s5] sm:$0xff]
      %v274 = vld [vmem:[%s3] sm:$0xff]
      %v275 = vld [vmem:[%s3 + $0x8] sm:$0xff]
      %v276 = vld [vmem:[%s261] sm:$0xff]
      %v277 = vld [vmem:[%s261 + $0x8] sm:$0xff]
      %280 = vrot.lane.b32.xlu0 %v276, 11
      %v281 = vpop.permute.xlu0 %280
      %282 = vrot.lane.b32.xlu0 %v277, 11
      %v283 = vpop.permute.xlu0 %282
      %vm284 = vcmask 89088
      %v285 = vsel %vm284, %v281, %v283
      %v288 = vsel %vm284, 0.0, %v281
      %289 = vrot.lane.b32.xlu0 %v276, 10
      %v290 = vpop.permute.xlu0 %289
      %291 = vrot.lane.b32.xlu0 %v277, 10
      %v292 = vpop.permute.xlu0 %291
      %vm293 = vcmask 80896
      %v294 = vsel %vm293, %v290, %v292
      %v297 = vsel %vm293, 0.0, %v290
      %298 = vrot.lane.b32.xlu0 %v276, 9
      %v299 = vpop.permute.xlu0 %298
      %300 = vrot.lane.b32.xlu0 %v277, 9
      %v301 = vpop.permute.xlu0 %300
      %vm302 = vcmask 72704
      %v303 = vsel %vm302, %v299, %v301
      %v306 = vsel %vm302, 0.0, %v299
      %307 = vrot.lane.b32.xlu0 %v276, 1
      %v308 = vpop.permute.xlu0 %307
      %309 = vrot.lane.b32.xlu0 %v277, 1
      %v310 = vpop.permute.xlu0 %309
      %vm311 = vcmask 7168
      %v312 = vsel %vm311, %v308, %v310
      %v315 = vsel %vm311, 0.0, %v308
      %316 = vrot.lane.b32.xlu0 %v276, 127
      %v317 = vpop.permute.xlu0 %316
      %318 = vrot.lane.b32.xlu0 %v277, 127
      %v319 = vpop.permute.xlu0 %318
      %vm320 = vcmask 1039360
      %v321 = vsel %vm320, %v317, %v319
      %v324 = vsel %vm320, %v319, 0.0
      %325 = vrot.lane.b32.xlu0 %v276, 119
      %v326 = vpop.permute.xlu0 %325
      %327 = vrot.lane.b32.xlu0 %v277, 119
      %v328 = vpop.permute.xlu0 %327
      %vm329 = vcmask 973824
      %v330 = vsel %vm329, %v326, %v328
      %v333 = vsel %vm329, %v328, 0.0
      %334 = vrot.lane.b32.xlu0 %v276, 118
      %v335 = vpop.permute.xlu0 %334
      %336 = vrot.lane.b32.xlu0 %v277, 118
      %v337 = vpop.permute.xlu0 %336
      %vm338 = vcmask 965632
      %v339 = vsel %vm338, %v335, %v337
      %v342 = vsel %vm338, %v337, 0.0
      %343 = vrot.lane.b32.xlu0 %v276, 117
      %v344 = vpop.permute.xlu0 %343
      %345 = vrot.lane.b32.xlu0 %v277, 117
      %v346 = vpop.permute.xlu0 %345
      %vm347 = vcmask 957440
      %v348 = vsel %vm347, %v344, %v346
      %v351 = vsel %vm347, %v346, 0.0
      %353 = vset.pattern.permute.xlu0 0
      %354 = vperm.xlu0 %353, %v273
      %v355 = vpop.permute.xlu0 %354
      %vm357 = vcmask 588800
      %v359 = vsel %vm357, %v274, 0
      %361 = vmatprep.subr.mxu0 %v285
      %362 = vmatpush1.msra.mxu0 %v288
      %363 = vmatprep.subr.mxu0 %v294
      %364 = vmatpush1.msra.mxu0 %v297
      %365 = vmatprep.subr.mxu0 %v303
      %366 = vmatpush1.msra.mxu0 %v306
      %367 = vmatprep.subr.mxu0 %v312
      %368 = vmatpush1.msra.mxu0 %v315
      %369 = vmatprep.subr.mxu0 %v277
      %370 = vmatpush1.msra.mxu0 %v276
      %371 = vmatprep.subr.mxu0 %v324
      %372 = vmatpush1.msra.mxu0 %v321
      %373 = vmatprep.subr.mxu0 %v333
      %374 = vmatpush1.msra.mxu0 %v330
      %375 = vmatprep.subr.mxu0 %v342
      %376 = vmatpush1.msra.mxu0 %v339
      %377 = vmatprep.subr.mxu0 %v351
      %378 = vmatpush1.msra.mxu0 %v348
      %379 = vmatprep.subr.mxu0 0.0
      %380 = vmatpush1.msra.mxu0 0.0
      %381 = vmatprep.subr.mxu0 0.0
      %382 = vmatpush1.msra.mxu0 0.0
      %383 = vmatprep.subr.mxu0 0.0
      %384 = vmatpush1.msra.mxu0 0.0
      %385 = vmatprep.subr.mxu0 0.0
      %386 = vmatpush1.msra.mxu0 0.0
      %387 = vmatprep.subr.mxu0 0.0
      %388 = vmatpush1.msra.mxu0 0.0
      %389 = vmatprep.subr.mxu0 0.0
      %390 = vmatpush1.msra.mxu0 0.0
      %391 = vmatprep.subr.mxu0 0.0
      %392 = vmatpush1.msra.mxu0 0.0
      %393 = vmatprep.subr.mxu0 0.0
      %394 = vmatpush1.msra.mxu0 0.0
      %395 = vmatprep.subr.mxu0 0.0
      %396 = vmatpush1.msra.mxu0 0.0
      %397 = vmatprep.subr.mxu0 0.0
      %398 = vmatpush1.msra.mxu0 0.0
      %399 = vmatprep.subr.mxu0 0.0
      %400 = vmatpush1.msra.mxu0 0.0
      %401 = vmatprep.subr.mxu0 0.0
      %402 = vmatpush1.msra.mxu0 0.0
      %403 = vmatprep.subr.mxu0 0.0
      %404 = vmatpush1.msra.mxu0 0.0
      %405 = vmatprep.subr.mxu0 0.0
      %406 = vmatpush1.msra.mxu0 0.0
      %407 = vmatprep.subr.mxu0 0.0
      %408 = vmatpush1.msra.mxu0 0.0
      %409 = vmatprep.subr.mxu0 0.0
      %410 = vmatpush1.msra.mxu0 0.0
      %411 = vmatprep.subr.mxu0 0.0
      %412 = vmatpush1.msra.mxu0 0.0
      %413 = vmatprep.subr.mxu0 0.0
      %414 = vmatpush1.msra.mxu0 0.0
      %415 = vmatprep.subr.mxu0 0.0
      %416 = vmatpush1.msra.mxu0 0.0
      %417 = vmatprep.subr.mxu0 0.0
      %418 = vmatpush1.msra.mxu0 0.0
      %419 = vmatprep.subr.mxu0 0.0
      %420 = vmatpush1.msra.mxu0 0.0
      %421 = vmatprep.subr.mxu0 0.0
      %422 = vmatpush1.msra.mxu0 0.0
      %423 = vmatprep.subr.mxu0 0.0
      %424 = vmatpush1.msra.mxu0 0.0
      %425 = vmatprep.mubr.f32.mxu0 0.0
      %426 = vmatmul.mubr.f32.gmra.mrb[0].mxu0 %v359
      %v427 = vpop.f32.mrb[0].mxu0
      %v428 = vadd.f32 %v355, %v427
      %v429 = vpop.f32.mrb[0].mxu0
      %v430 = vadd.f32 %v355, %v429
      %431 = vdwg.mxu0
      %v432 = vmax.f32 %v428, 0.0
      %v433 = vmax.f32 %v430, 0.0
      %v435 = vlaneseq
      %v436 = vshrl.u32 %v435, 7
      %v437 = vsub.s32 0, %v436
      %v438 = vrot.slane %v272, %v437
      %v439 = vlaneseq
      %v440 = vshrl.u32 %v439, 7
      %v441 = vsub.s32 1, %v440
      %v442 = vrot.slane %v272, %v441
      %v445 = vmul.f32 %v432, %v438
      %v446 = vmul.f32 %v433, %v442
      %449 = vrot.lane.b32.xlu0 %v445, 11
      %v450 = vpop.permute.xlu0 %449
      %451 = vrot.lane.b32.xlu0 %v446, 11
      %v452 = vpop.permute.xlu0 %451
      %v453 = vsel %vm284, %v450, %v452
      %v456 = vsel %vm284, 0.0, %v450
      %457 = vrot.lane.b32.xlu0 %v445, 10
      %v458 = vpop.permute.xlu0 %457
      %459 = vrot.lane.b32.xlu0 %v446, 10
      %v460 = vpop.permute.xlu0 %459
      %v461 = vsel %vm293, %v458, %v460
      %v464 = vsel %vm293, 0.0, %v458
      %465 = vrot.lane.b32.xlu0 %v445, 9
      %v466 = vpop.permute.xlu0 %465
      %467 = vrot.lane.b32.xlu0 %v446, 9
      %v468 = vpop.permute.xlu0 %467
      %v469 = vsel %vm302, %v466, %v468
      %v472 = vsel %vm302, 0.0, %v466
      %473 = vrot.lane.b32.xlu0 %v445, 1
      %v474 = vpop.permute.xlu0 %473
      %475 = vrot.lane.b32.xlu0 %v446, 1
      %v476 = vpop.permute.xlu0 %475
      %v477 = vsel %vm311, %v474, %v476
      %v480 = vsel %vm311, 0.0, %v474
      %481 = vrot.lane.b32.xlu0 %v445, 127
      %v482 = vpop.permute.xlu0 %481
      %483 = vrot.lane.b32.xlu0 %v446, 127
      %v484 = vpop.permute.xlu0 %483
      %v485 = vsel %vm320, %v482, %v484
      %v488 = vsel %vm320, %v484, 0.0
      %489 = vrot.lane.b32.xlu0 %v445, 119
      %v490 = vpop.permute.xlu0 %489
      %491 = vrot.lane.b32.xlu0 %v446, 119
      %v492 = vpop.permute.xlu0 %491
      %v493 = vsel %vm329, %v490, %v492
      %v496 = vsel %vm329, %v492, 0.0
      %497 = vrot.lane.b32.xlu0 %v445, 118
      %v498 = vpop.permute.xlu0 %497
      %499 = vrot.lane.b32.xlu0 %v446, 118
      %v500 = vpop.permute.xlu0 %499
      %v501 = vsel %vm338, %v498, %v500
      %v504 = vsel %vm338, %v500, 0.0
      %505 = vrot.lane.b32.xlu0 %v445, 117
      %v506 = vpop.permute.xlu0 %505
      %507 = vrot.lane.b32.xlu0 %v446, 117
      %v508 = vpop.permute.xlu0 %507
      %v509 = vsel %vm347, %v506, %v508
      %v512 = vsel %vm347, %v508, 0.0
      %513 = vset.pattern.permute.xlu0 1
      %514 = vperm.xlu0 %513, %v273
      %v515 = vpop.permute.xlu0 %514
      %v518 = vsel %vm357, %v275, 0
      %520 = vmatprep.subr.mxu0 %v453
      %521 = vmatpush1.msra.mxu0 %v456
      %522 = vmatprep.subr.mxu0 %v461
      %523 = vmatpush1.msra.mxu0 %v464
      %524 = vmatprep.subr.mxu0 %v469
      %525 = vmatpush1.msra.mxu0 %v472
      %526 = vmatprep.subr.mxu0 %v477
      %527 = vmatpush1.msra.mxu0 %v480
      %528 = vmatprep.subr.mxu0 %v446
      %529 = vmatpush1.msra.mxu0 %v445
      %530 = vmatprep.subr.mxu0 %v488
      %531 = vmatpush1.msra.mxu0 %v485
      %532 = vmatprep.subr.mxu0 %v496
      %533 = vmatpush1.msra.mxu0 %v493
      %534 = vmatprep.subr.mxu0 %v504
      %535 = vmatpush1.msra.mxu0 %v501
      %536 = vmatprep.subr.mxu0 %v512
      %537 = vmatpush1.msra.mxu0 %v509
      %538 = vmatprep.subr.mxu0 0.0
      %539 = vmatpush1.msra.mxu0 0.0
      %540 = vmatprep.subr.mxu0 0.0
      %541 = vmatpush1.msra.mxu0 0.0
      %542 = vmatprep.subr.mxu0 0.0
      %543 = vmatpush1.msra.mxu0 0.0
      %544 = vmatprep.subr.mxu0 0.0
      %545 = vmatpush1.msra.mxu0 0.0
      %546 = vmatprep.subr.mxu0 0.0
      %547 = vmatpush1.msra.mxu0 0.0
      %548 = vmatprep.subr.mxu0 0.0
      %549 = vmatpush1.msra.mxu0 0.0
      %550 = vmatprep.subr.mxu0 0.0
      %551 = vmatpush1.msra.mxu0 0.0
      %552 = vmatprep.subr.mxu0 0.0
      %553 = vmatpush1.msra.mxu0 0.0
      %554 = vmatprep.subr.mxu0 0.0
      %555 = vmatpush1.msra.mxu0 0.0
      %556 = vmatprep.subr.mxu0 0.0
      %557 = vmatpush1.msra.mxu0 0.0
      %558 = vmatprep.subr.mxu0 0.0
      %559 = vmatpush1.msra.mxu0 0.0
      %560 = vmatprep.subr.mxu0 0.0
      %561 = vmatpush1.msra.mxu0 0.0
      %562 = vmatprep.subr.mxu0 0.0
      %563 = vmatpush1.msra.mxu0 0.0
      %564 = vmatprep.subr.mxu0 0.0
      %565 = vmatpush1.msra.mxu0 0.0
      %566 = vmatprep.subr.mxu0 0.0
      %567 = vmatpush1.msra.mxu0 0.0
      %568 = vmatprep.subr.mxu0 0.0
      %569 = vmatpush1.msra.mxu0 0.0
      %570 = vmatprep.subr.mxu0 0.0
      %571 = vmatpush1.msra.mxu0 0.0
      %572 = vmatprep.subr.mxu0 0.0
      %573 = vmatpush1.msra.mxu0 0.0
      %574 = vmatprep.subr.mxu0 0.0
      %575 = vmatpush1.msra.mxu0 0.0
      %576 = vmatprep.subr.mxu0 0.0
      %577 = vmatpush1.msra.mxu0 0.0
      %578 = vmatprep.subr.mxu0 0.0
      %579 = vmatpush1.msra.mxu0 0.0
      %580 = vmatprep.subr.mxu0 0.0
      %581 = vmatpush1.msra.mxu0 0.0
      %582 = vmatprep.subr.mxu0 0.0
      %583 = vmatpush1.msra.mxu0 0.0
      %584 = vmatprep.mubr.f32.mxu0 0.0
      %585 = vmatmul.mubr.f32.gmra.mrb[0].mxu0 %v518
      %v586 = vpop.f32.mrb[0].mxu0
      %v587 = vadd.f32 %v515, %v586
      %v588 = vpop.f32.mrb[0].mxu0
      %v589 = vadd.f32 %v515, %v588
      %590 = vdwg.mxu0
      %v591 = vmax.f32 %v587, 0.0
      %v592 = vmax.f32 %v589, 0.0
      %v593 = vmul.f32 %v591, %v438
      %v594 = vmul.f32 %v592, %v442
      %v595 = vld [vmem:[%s266] sm:$0xff]
      %v597 = vcombine.high %v595, %v595
      %v598 = vld [vmem:[%s4] sm:$0xff]
      %v599 = vld [vmem:[%s4 + $0x8] sm:$0xff]
      %v600 = vld [vmem:[%s4 + $0x10] sm:$0xff]
      %v601 = vld [vmem:[%s4 + $0x18] sm:$0xff]
      %v602 = vld [vmem:[%s4 + $0x20] sm:$0xff]
      %v603 = vld [vmem:[%s4 + $0x28] sm:$0xff]
      %v604 = vld [vmem:[%s4 + $0x30] sm:$0xff]
      %v605 = vld [vmem:[%s4 + $0x38] sm:$0xff]
      %v606 = vld [vmem:[%s4 + $0x40] sm:$0xff]
      %v607 = vld [vmem:[%s4 + $0x48] sm:$0xff]
      %v608 = vld [vmem:[%s4 + $0x50] sm:$0xff]
      %v609 = vld [vmem:[%s4 + $0x58] sm:$0xff]
      %v610 = vld [vmem:[%s4 + $0x60] sm:$0xff]
      %v611 = vld [vmem:[%s4 + $0x68] sm:$0xff]
      %v612 = vld [vmem:[%s4 + $0x70] sm:$0xff]
      %v613 = vld [vmem:[%s4 + $0x78] sm:$0xff]
      %v614 = vld [vmem:[%s4 + $0x80] sm:$0xff]
      %v615 = vld [vmem:[%s4 + $0x88] sm:$0xff]
      %vm616 = vcmask 97280
      %v618 = vsel %vm616, %v598, 0
      %v621 = vsel %vm616, %v599, 0
      %v624 = vsel %vm616, %v600, 0
      %v627 = vsel %vm616, %v601, 0
      %v630 = vsel %vm616, %v602, 0
      %v633 = vsel %vm616, %v603, 0
      %v636 = vsel %vm616, %v604, 0
      %v639 = vsel %vm616, %v605, 0
      %v642 = vsel %vm616, %v606, 0
      %v645 = vsel %vm616, %v607, 0
      %v648 = vsel %vm616, %v608, 0
      %v651 = vsel %vm616, %v609, 0
      %v654 = vsel %vm616, %v610, 0
      %v657 = vsel %vm616, %v611, 0
      %v660 = vsel %vm616, %v612, 0
      %v663 = vsel %vm616, %v613, 0
      %v666 = vsel %vm616, %v614, 0
      %v669 = vsel %vm616, %v615, 0
      %vm671 = vcmask 1043456
      %v672 = vsel %vm671, %v595, 0
      %v674 = vsel %vm671, %v597, 0
      %676 = vmatprep.subr.mxu0 %v594
      %677 = vmatpush1.msra.mxu0 %v593
      %678 = vmatprep.subr.mxu0 %v674
      %679 = vmatpush1.msra.mxu0 %v672
      %680 = vmatprep.subr.mxu0 0.0
      %681 = vmatpush1.msra.mxu0 0.0
      %682 = vmatprep.subr.mxu0 0.0
      %683 = vmatpush1.msra.mxu0 0.0
      %684 = vmatprep.subr.mxu0 0.0
      %685 = vmatpush1.msra.mxu0 0.0
      %686 = vmatprep.subr.mxu0 0.0
      %687 = vmatpush1.msra.mxu0 0.0
      %688 = vmatprep.subr.mxu0 0.0
      %689 = vmatpush1.msra.mxu0 0.0
      %690 = vmatprep.subr.mxu0 0.0
      %691 = vmatpush1.msra.mxu0 0.0
      %692 = vmatprep.subr.mxu0 0.0
      %693 = vmatpush1.msra.mxu0 0.0
      %694 = vmatprep.subr.mxu0 0.0
      %695 = vmatpush1.msra.mxu0 0.0
      %696 = vmatprep.subr.mxu0 0.0
      %697 = vmatpush1.msra.mxu0 0.0
      %698 = vmatprep.subr.mxu0 0.0
      %699 = vmatpush1.msra.mxu0 0.0
      %700 = vmatprep.subr.mxu0 0.0
      %701 = vmatpush1.msra.mxu0 0.0
      %702 = vmatprep.subr.mxu0 0.0
      %703 = vmatpush1.msra.mxu0 0.0
      %704 = vmatprep.subr.mxu0 0.0
      %705 = vmatpush1.msra.mxu0 0.0
      %706 = vmatprep.subr.mxu0 0.0
      %707 = vmatpush1.msra.mxu0 0.0
      %708 = vmatprep.subr.mxu0 0.0
      %709 = vmatpush1.msra.mxu0 0.0
      %710 = vmatprep.subr.mxu0 0.0
      %711 = vmatpush1.msra.mxu0 0.0
      %712 = vmatprep.subr.mxu0 0.0
      %713 = vmatpush1.msra.mxu0 0.0
      %714 = vmatprep.subr.mxu0 0.0
      %715 = vmatpush1.msra.mxu0 0.0
      %716 = vmatprep.subr.mxu0 0.0
      %717 = vmatpush1.msra.mxu0 0.0
      %718 = vmatprep.subr.mxu0 0.0
      %719 = vmatpush1.msra.mxu0 0.0
      %720 = vmatprep.subr.mxu0 0.0
      %721 = vmatpush1.msra.mxu0 0.0
      %722 = vmatprep.subr.mxu0 0.0
      %723 = vmatpush1.msra.mxu0 0.0
      %724 = vmatprep.subr.mxu0 0.0
      %725 = vmatpush1.msra.mxu0 0.0
      %726 = vmatprep.subr.mxu0 0.0
      %727 = vmatpush1.msra.mxu0 0.0
      %728 = vmatprep.subr.mxu0 0.0
      %729 = vmatpush1.msra.mxu0 0.0
      %730 = vmatprep.subr.mxu0 0.0
      %731 = vmatpush1.msra.mxu0 0.0
      %732 = vmatprep.subr.mxu0 0.0
      %733 = vmatpush1.msra.mxu0 0.0
      %734 = vmatprep.subr.mxu0 0.0
      %735 = vmatpush1.msra.mxu0 0.0
      %736 = vmatprep.subr.mxu0 0.0
      %737 = vmatpush1.msra.mxu0 0.0
      %738 = vmatprep.subr.mxu0 0.0
      %739 = vmatpush1.msra.mxu0 0.0
      %740 = vmatprep.mubr.f32.mxu0 0.0
      %741 = vmatmul.mubr.f32.gmra.mrb[0].mxu0 %v618
      %v742 = vpop.f32.mrb[0].mxu0
      %v743 = vadd.f32 0.0, %v742
      %v744 = vpop.f32.mrb[0].mxu0
      %v745 = vadd.f32 0.0, %v744
      %746 = vmatprep.mubr.f32.mxu0 0.0
      %747 = vmatmul.mubr.f32.gmra.mrb[0].mxu0 %v621
      %v748 = vpop.f32.mrb[0].mxu0
      %v749 = vadd.f32 0.0, %v748
      %v750 = vpop.f32.mrb[0].mxu0
      %v751 = vadd.f32 0.0, %v750
      %752 = vmatprep.mubr.f32.mxu0 0.0
      %753 = vmatmul.mubr.f32.gmra.mrb[0].mxu0 %v624
      %v754 = vpop.f32.mrb[0].mxu0
      %v755 = vadd.f32 0.0, %v754
      %v756 = vpop.f32.mrb[0].mxu0
      %v757 = vadd.f32 0.0, %v756
      %758 = vmatprep.mubr.f32.mxu0 0.0
      %759 = vmatmul.mubr.f32.gmra.mrb[0].mxu0 %v627
      %v760 = vpop.f32.mrb[0].mxu0
      %v761 = vadd.f32 0.0, %v760
      %v762 = vpop.f32.mrb[0].mxu0
      %v763 = vadd.f32 0.0, %v762
      %764 = vmatprep.mubr.f32.mxu0 0.0
      %765 = vmatmul.mubr.f32.gmra.mrb[0].mxu0 %v630
      %v766 = vpop.f32.mrb[0].mxu0
      %v767 = vadd.f32 0.0, %v766
      %v768 = vpop.f32.mrb[0].mxu0
      %v769 = vadd.f32 0.0, %v768
      %770 = vmatprep.mubr.f32.mxu0 0.0
      %771 = vmatmul.mubr.f32.gmra.mrb[0].mxu0 %v633
      %v772 = vpop.f32.mrb[0].mxu0
      %v773 = vadd.f32 0.0, %v772
      %v774 = vpop.f32.mrb[0].mxu0
      %v775 = vadd.f32 0.0, %v774
      %776 = vmatprep.mubr.f32.mxu0 0.0
      %777 = vmatmul.mubr.f32.gmra.mrb[0].mxu0 %v636
      %v778 = vpop.f32.mrb[0].mxu0
      %v779 = vadd.f32 0.0, %v778
      %v780 = vpop.f32.mrb[0].mxu0
      %v781 = vadd.f32 0.0, %v780
      %782 = vmatprep.mubr.f32.mxu0 0.0
      %783 = vmatmul.mubr.f32.gmra.mrb[0].mxu0 %v639
      %v784 = vpop.f32.mrb[0].mxu0
      %v785 = vadd.f32 0.0, %v784
      %v786 = vpop.f32.mrb[0].mxu0
      %v787 = vadd.f32 0.0, %v786
      %788 = vmatprep.mubr.f32.mxu0 0.0
      %789 = vmatmul.mubr.f32.gmra.mrb[0].mxu0 %v642
      %v790 = vpop.f32.mrb[0].mxu0
      %v791 = vadd.f32 0.0, %v790
      %v792 = vpop.f32.mrb[0].mxu0
      %v793 = vadd.f32 0.0, %v792
      %794 = vmatprep.mubr.f32.mxu0 0.0
      %795 = vmatmul.mubr.f32.gmra.mrb[0].mxu0 %v645
      %v796 = vpop.f32.mrb[0].mxu0
      %v797 = vadd.f32 0.0, %v796
      %v798 = vpop.f32.mrb[0].mxu0
      %v799 = vadd.f32 0.0, %v798
      %800 = vmatprep.mubr.f32.mxu0 0.0
      %801 = vmatmul.mubr.f32.gmra.mrb[0].mxu0 %v648
      %v802 = vpop.f32.mrb[0].mxu0
      %v803 = vadd.f32 0.0, %v802
      %v804 = vpop.f32.mrb[0].mxu0
      %v805 = vadd.f32 0.0, %v804
      %806 = vmatprep.mubr.f32.mxu0 0.0
      %807 = vmatmul.mubr.f32.gmra.mrb[0].mxu0 %v651
      %v808 = vpop.f32.mrb[0].mxu0
      %v809 = vadd.f32 0.0, %v808
      %v810 = vpop.f32.mrb[0].mxu0
      %v811 = vadd.f32 0.0, %v810
      %812 = vmatprep.mubr.f32.mxu0 0.0
      %813 = vmatmul.mubr.f32.gmra.mrb[0].mxu0 %v654
      %v814 = vpop.f32.mrb[0].mxu0
      %v815 = vadd.f32 0.0, %v814
      %v816 = vpop.f32.mrb[0].mxu0
      %v817 = vadd.f32 0.0, %v816
      %818 = vmatprep.mubr.f32.mxu0 0.0
      %819 = vmatmul.mubr.f32.gmra.mrb[0].mxu0 %v657
      %v820 = vpop.f32.mrb[0].mxu0
      %v821 = vadd.f32 0.0, %v820
      %v822 = vpop.f32.mrb[0].mxu0
      %v823 = vadd.f32 0.0, %v822
      %824 = vmatprep.mubr.f32.mxu0 0.0
      %825 = vmatmul.mubr.f32.gmra.mrb[0].mxu0 %v660
      %v826 = vpop.f32.mrb[0].mxu0
      %v827 = vadd.f32 0.0, %v826
      %v828 = vpop.f32.mrb[0].mxu0
      %v829 = vadd.f32 0.0, %v828
      %830 = vmatprep.mubr.f32.mxu0 0.0
      %831 = vmatmul.mubr.f32.gmra.mrb[0].mxu0 %v663
      %v832 = vpop.f32.mrb[0].mxu0
      %v833 = vadd.f32 0.0, %v832
      %v834 = vpop.f32.mrb[0].mxu0
      %v835 = vadd.f32 0.0, %v834
      %836 = vmatprep.mubr.f32.mxu0 0.0
      %837 = vmatmul.mubr.f32.gmra.mrb[0].mxu0 %v666
      %v838 = vpop.f32.mrb[0].mxu0
      %v839 = vadd.f32 0.0, %v838
      %v840 = vpop.f32.mrb[0].mxu0
      %v841 = vadd.f32 0.0, %v840
      %842 = vmatprep.mubr.f32.mxu0 0.0
      %843 = vmatmul.mubr.f32.gmra.mrb[0].mxu0 %v669
      %v844 = vpop.f32.mrb[0].mxu0
      %v845 = vadd.f32 0.0, %v844
      %v846 = vpop.f32.mrb[0].mxu0
      %v847 = vadd.f32 0.0, %v846
      %848 = vdwg.mxu0
      %853 = vrot.lane.b32.xlu0 %v767, 1
      %v854 = vpop.permute.xlu0 %853
      %855 = vrot.lane.b32.xlu0 %v769, 1
      %v856 = vpop.permute.xlu0 %855
      %857 = vrot.lane.b32.xlu0 %v773, 1
      %v858 = vpop.permute.xlu0 %857
      %859 = vrot.lane.b32.xlu0 %v775, 1
      %v860 = vpop.permute.xlu0 %859
      %v861 = vsel %vm311, %v854, %v856
      %v862 = vsel %vm311, %v858, %v860
      %v867 = vsel %vm311, 0.0, %v854
      %v868 = vsel %vm311, 0.0, %v858
      %v869 = vadd.f32 %v743, %v867
      %v870 = vadd.f32 %v745, %v861
      %v871 = vadd.f32 %v749, %v868
      %v872 = vadd.f32 %v751, %v862
      %877 = vrot.lane.b32.xlu0 %v815, 10
      %v878 = vpop.permute.xlu0 %877
      %879 = vrot.lane.b32.xlu0 %v817, 10
      %v880 = vpop.permute.xlu0 %879
      %881 = vrot.lane.b32.xlu0 %v821, 10
      %v882 = vpop.permute.xlu0 %881
      %883 = vrot.lane.b32.xlu0 %v823, 10
      %v884 = vpop.permute.xlu0 %883
      %v885 = vsel %vm293, %v878, %v880
      %v886 = vsel %vm293, %v882, %v884
      %v891 = vsel %vm293, 0.0, %v878
      %v892 = vsel %vm293, 0.0, %v882
      %v893 = vadd.f32 %v869, %v891
      %v894 = vadd.f32 %v870, %v885
      %v895 = vadd.f32 %v871, %v892
      %v896 = vadd.f32 %v872, %v886
      %901 = vrot.lane.b32.xlu0 %v839, 11
      %v902 = vpop.permute.xlu0 %901
      %903 = vrot.lane.b32.xlu0 %v841, 11
      %v904 = vpop.permute.xlu0 %903
      %905 = vrot.lane.b32.xlu0 %v845, 11
      %v906 = vpop.permute.xlu0 %905
      %907 = vrot.lane.b32.xlu0 %v847, 11
      %v908 = vpop.permute.xlu0 %907
      %v909 = vsel %vm284, %v902, %v904
      %v910 = vsel %vm284, %v906, %v908
      %v915 = vsel %vm284, 0.0, %v902
      %v916 = vsel %vm284, 0.0, %v906
      %v917 = vadd.f32 %v893, %v915
      %v918 = vadd.f32 %v894, %v909
      %v919 = vadd.f32 %v895, %v916
      %v920 = vadd.f32 %v896, %v910
      %921 = vset.pattern.permute.xlu0 2
      %922 = vperm.xlu0 %921, %v273
      %v923 = vpop.permute.xlu0 %922
      %v925 = vadd.f32 %v917, %v923
      %v926 = vadd.f32 %v918, %v923
      %927 = vset.pattern.permute.xlu0 3
      %928 = vperm.xlu0 %927, %v273
      %v929 = vpop.permute.xlu0 %928
      %v930 = vrot.slane %v929, 4
      %v932 = vadd.f32 %v917, %v930
      %v933 = vadd.f32 %v918, %v930
      %934 = vset.pattern.permute.xlu0 4
      %935 = vperm.xlu0 %934, %v273
      %v936 = vpop.permute.xlu0 %935
      %v937 = vrot.slane %v936, 4
      %v939 = vadd.f32 %v919, %v937
      %v940 = vadd.f32 %v920, %v937
      %v941 = vadd.f32 %v919, %v925
      %v942 = vadd.f32 %v920, %v926
      %947 = vrot.lane.b32.xlu0 %v827, 10
      %v948 = vpop.permute.xlu0 %947
      %949 = vrot.lane.b32.xlu0 %v829, 10
      %v950 = vpop.permute.xlu0 %949
      %951 = vrot.lane.b32.xlu0 %v833, 10
      %v952 = vpop.permute.xlu0 %951
      %953 = vrot.lane.b32.xlu0 %v835, 10
      %v954 = vpop.permute.xlu0 %953
      %v955 = vsel %vm293, %v948, %v950
      %v956 = vsel %vm293, %v952, %v954
      %v961 = vsel %vm293, 0.0, %v948
      %v962 = vsel %vm293, 0.0, %v952
      %v963 = vadd.f32 %v755, %v961
      %v964 = vadd.f32 %v757, %v955
      %v965 = vadd.f32 %v761, %v962
      %v966 = vadd.f32 %v763, %v956
      %v967 = vadd.f32 %v963, %v923
      %v968 = vadd.f32 %v964, %v923
      %v969 = vadd.f32 %v963, %v930
      %v970 = vadd.f32 %v964, %v930
      %v971 = vadd.f32 %v965, %v937
      %v972 = vadd.f32 %v966, %v937
      %v973 = vadd.f32 %v965, %v967
      %v974 = vadd.f32 %v966, %v968
      %979 = vrot.lane.b32.xlu0 %v803, 1
      %v980 = vpop.permute.xlu0 %979
      %981 = vrot.lane.b32.xlu0 %v805, 1
      %v982 = vpop.permute.xlu0 %981
      %983 = vrot.lane.b32.xlu0 %v809, 1
      %v984 = vpop.permute.xlu0 %983
      %985 = vrot.lane.b32.xlu0 %v811, 1
      %v986 = vpop.permute.xlu0 %985
      %v987 = vsel %vm311, %v980, %v982
      %v988 = vsel %vm311, %v984, %v986
      %v993 = vsel %vm311, 0.0, %v980
      %v994 = vsel %vm311, 0.0, %v984
      %v995 = vadd.f32 %v779, %v993
      %v996 = vadd.f32 %v781, %v987
      %v997 = vadd.f32 %v785, %v994
      %v998 = vadd.f32 %v787, %v988
      %v999 = vadd.f32 %v995, %v923
      %v1000 = vadd.f32 %v996, %v923
      %v1001 = vadd.f32 %v995, %v930
      %v1002 = vadd.f32 %v996, %v930
      %v1003 = vadd.f32 %v997, %v937
      %v1004 = vadd.f32 %v998, %v937
      %v1005 = vadd.f32 %v997, %v999
      %v1006 = vadd.f32 %v998, %v1000
      %v1007 = vadd.f32 %v791, %v923
      %v1008 = vadd.f32 %v793, %v923
      %v1009 = vadd.f32 %v791, %v930
      %v1010 = vadd.f32 %v793, %v930
      %v1011 = vadd.f32 %v797, %v937
      %v1012 = vadd.f32 %v799, %v937
      %v1013 = vadd.f32 %v797, %v1007
      %v1014 = vadd.f32 %v799, %v1008
      %1015 = vset.pattern.permute.xlu0 5
      %1016 = vperm.xlu0 %1015, %v273
      %v1017 = vpop.permute.xlu0 %1016
      %1019 = vrot.lane.b32.xlu0 %v273, 120
      %v1020 = vpop.permute.xlu0 %1019
      %vm1021 = vcmask 31744
      %v1022 = vsel %vm1021, %v1020, 0
      %v1025 = vsel %vm671, %v941, 0
      %v1028 = vsel %vm671, %v942, 0
      %v1031 = vsel %vm671, %v973, 0
      %v1034 = vsel %vm671, %v974, 0
      %v1037 = vsel %vm671, %v1005, 0
      %v1040 = vsel %vm671, %v1006, 0
      %v1043 = vsel %vm671, %v1013, 0
      %v1046 = vsel %vm671, %v1014, 0
      %1048 = vmatprep.subr.mxu0 %v1028
      %1049 = vmatpush1.msra.mxu0 %v1025
      %1050 = vmatprep.subr.mxu0 0.0
      %1051 = vmatpush1.msra.mxu0 0.0
      %1052 = vmatprep.subr.mxu0 0.0
      %1053 = vmatpush1.msra.mxu0 0.0
      %1054 = vmatprep.subr.mxu0 0.0
      %1055 = vmatpush1.msra.mxu0 0.0
      %1056 = vmatprep.subr.mxu0 0.0
      %1057 = vmatpush1.msra.mxu0 0.0
      %1058 = vmatprep.subr.mxu0 0.0
      %1059 = vmatpush1.msra.mxu0 0.0
      %1060 = vmatprep.subr.mxu0 0.0
      %1061 = vmatpush1.msra.mxu0 0.0
      %1062 = vmatprep.subr.mxu0 0.0
      %1063 = vmatpush1.msra.mxu0 0.0
      %1064 = vmatprep.subr.mxu0 0.0
      %1065 = vmatpush1.msra.mxu0 0.0
      %1066 = vmatprep.subr.mxu0 0.0
      %1067 = vmatpush1.msra.mxu0 0.0
      %1068 = vmatprep.subr.mxu0 0.0
      %1069 = vmatpush1.msra.mxu0 0.0
      %1070 = vmatprep.subr.mxu0 0.0
      %1071 = vmatpush1.msra.mxu0 0.0
      %1072 = vmatprep.subr.mxu0 0.0
      %1073 = vmatpush1.msra.mxu0 0.0
      %1074 = vmatprep.subr.mxu0 0.0
      %1075 = vmatpush1.msra.mxu0 0.0
      %1076 = vmatprep.subr.mxu0 0.0
      %1077 = vmatpush1.msra.mxu0 0.0
      %1078 = vmatprep.subr.mxu0 0.0
      %1079 = vmatpush1.msra.mxu0 0.0
      %1080 = vmatprep.subr.mxu0 0.0
      %1081 = vmatpush1.msra.mxu0 0.0
      %1082 = vmatprep.subr.mxu0 0.0
      %1083 = vmatpush1.msra.mxu0 0.0
      %1084 = vmatprep.subr.mxu0 0.0
      %1085 = vmatpush1.msra.mxu0 0.0
      %1086 = vmatprep.subr.mxu0 0.0
      %1087 = vmatpush1.msra.mxu0 0.0
      %1088 = vmatprep.subr.mxu0 0.0
      %1089 = vmatpush1.msra.mxu0 0.0
      %1090 = vmatprep.subr.mxu0 0.0
      %1091 = vmatpush1.msra.mxu0 0.0
      %1092 = vmatprep.subr.mxu0 0.0
      %1093 = vmatpush1.msra.mxu0 0.0
      %1094 = vmatprep.subr.mxu0 0.0
      %1095 = vmatpush1.msra.mxu0 0.0
      %1096 = vmatprep.subr.mxu0 0.0
      %1097 = vmatpush1.msra.mxu0 0.0
      %1098 = vmatprep.subr.mxu0 0.0
      %1099 = vmatpush1.msra.mxu0 0.0
      %1100 = vmatprep.subr.mxu0 0.0
      %1101 = vmatpush1.msra.mxu0 0.0
      %1102 = vmatprep.subr.mxu0 0.0
      %1103 = vmatpush1.msra.mxu0 0.0
      %1104 = vmatprep.subr.mxu0 0.0
      %1105 = vmatpush1.msra.mxu0 0.0
      %1106 = vmatprep.subr.mxu0 0.0
      %1107 = vmatpush1.msra.mxu0 0.0
      %1108 = vmatprep.subr.mxu0 0.0
      %1109 = vmatpush1.msra.mxu0 0.0
      %1110 = vmatprep.subr.mxu0 0.0
      %1111 = vmatpush1.msra.mxu0 0.0
      %1112 = vmatprep.mubr.f32.mxu0 0.0
      %1113 = vmatmul.mubr.f32.gmra.mrb[0].mxu0 %v1022
      %v1114 = vpop.f32.mrb[0].mxu0
      %v1115 = vadd.f32 %v1017, %v1114
      %v1116 = vpop.f32.mrb[0].mxu0
      %v1117 = vadd.f32 %v1017, %v1116
      %1118 = vdwg.mxu0
      %1119 = vmatprep.subr.mxu0 %v1034
      %1120 = vmatpush1.msra.mxu0 %v1031
      %1121 = vmatprep.subr.mxu0 0.0
      %1122 = vmatpush1.msra.mxu0 0.0
      %1123 = vmatprep.subr.mxu0 0.0
      %1124 = vmatpush1.msra.mxu0 0.0
      %1125 = vmatprep.subr.mxu0 0.0
      %1126 = vmatpush1.msra.mxu0 0.0
      %1127 = vmatprep.subr.mxu0 0.0
      %1128 = vmatpush1.msra.mxu0 0.0
      %1129 = vmatprep.subr.mxu0 0.0
      %1130 = vmatpush1.msra.mxu0 0.0
      %1131 = vmatprep.subr.mxu0 0.0
      %1132 = vmatpush1.msra.mxu0 0.0
      %1133 = vmatprep.subr.mxu0 0.0
      %1134 = vmatpush1.msra.mxu0 0.0
      %1135 = vmatprep.subr.mxu0 0.0
      %1136 = vmatpush1.msra.mxu0 0.0
      %1137 = vmatprep.subr.mxu0 0.0
      %1138 = vmatpush1.msra.mxu0 0.0
      %1139 = vmatprep.subr.mxu0 0.0
      %1140 = vmatpush1.msra.mxu0 0.0
      %1141 = vmatprep.subr.mxu0 0.0
      %1142 = vmatpush1.msra.mxu0 0.0
      %1143 = vmatprep.subr.mxu0 0.0
      %1144 = vmatpush1.msra.mxu0 0.0
      %1145 = vmatprep.subr.mxu0 0.0
      %1146 = vmatpush1.msra.mxu0 0.0
      %1147 = vmatprep.subr.mxu0 0.0
      %1148 = vmatpush1.msra.mxu0 0.0
      %1149 = vmatprep.subr.mxu0 0.0
      %1150 = vmatpush1.msra.mxu0 0.0
      %1151 = vmatprep.subr.mxu0 0.0
      %1152 = vmatpush1.msra.mxu0 0.0
      %1153 = vmatprep.subr.mxu0 0.0
      %1154 = vmatpush1.msra.mxu0 0.0
      %1155 = vmatprep.subr.mxu0 0.0
      %1156 = vmatpush1.msra.mxu0 0.0
      %1157 = vmatprep.subr.mxu0 0.0
      %1158 = vmatpush1.msra.mxu0 0.0
      %1159 = vmatprep.subr.mxu0 0.0
      %1160 = vmatpush1.msra.mxu0 0.0
      %1161 = vmatprep.subr.mxu0 0.0
      %1162 = vmatpush1.msra.mxu0 0.0
      %1163 = vmatprep.subr.mxu0 0.0
      %1164 = vmatpush1.msra.mxu0 0.0
      %1165 = vmatprep.subr.mxu0 0.0
      %1166 = vmatpush1.msra.mxu0 0.0
      %1167 = vmatprep.subr.mxu0 0.0
      %1168 = vmatpush1.msra.mxu0 0.0
      %1169 = vmatprep.subr.mxu0 0.0
      %1170 = vmatpush1.msra.mxu0 0.0
      %1171 = vmatprep.subr.mxu0 0.0
      %1172 = vmatpush1.msra.mxu0 0.0
      %1173 = vmatprep.subr.mxu0 0.0
      %1174 = vmatpush1.msra.mxu0 0.0
      %1175 = vmatprep.subr.mxu0 0.0
      %1176 = vmatpush1.msra.mxu0 0.0
      %1177 = vmatprep.subr.mxu0 0.0
      %1178 = vmatpush1.msra.mxu0 0.0
      %1179 = vmatprep.subr.mxu0 0.0
      %1180 = vmatpush1.msra.mxu0 0.0
      %1181 = vmatprep.subr.mxu0 0.0
      %1182 = vmatpush1.msra.mxu0 0.0
      %1183 = vmatprep.mubr.f32.mxu0 0.0
      %1184 = vmatmul.mubr.f32.gmra.mrb[0].mxu0 %v1022
      %v1185 = vpop.f32.mrb[0].mxu0
      %v1186 = vadd.f32 %v1017, %v1185
      %v1187 = vpop.f32.mrb[0].mxu0
      %v1188 = vadd.f32 %v1017, %v1187
      %1189 = vdwg.mxu0
      %1190 = vmatprep.subr.mxu0 %v1040
      %1191 = vmatpush1.msra.mxu0 %v1037
      %1192 = vmatprep.subr.mxu0 0.0
      %1193 = vmatpush1.msra.mxu0 0.0
      %1194 = vmatprep.subr.mxu0 0.0
      %1195 = vmatpush1.msra.mxu0 0.0
      %1196 = vmatprep.subr.mxu0 0.0
      %1197 = vmatpush1.msra.mxu0 0.0
      %1198 = vmatprep.subr.mxu0 0.0
      %1199 = vmatpush1.msra.mxu0 0.0
      %1200 = vmatprep.subr.mxu0 0.0
      %1201 = vmatpush1.msra.mxu0 0.0
      %1202 = vmatprep.subr.mxu0 0.0
      %1203 = vmatpush1.msra.mxu0 0.0
      %1204 = vmatprep.subr.mxu0 0.0
      %1205 = vmatpush1.msra.mxu0 0.0
      %1206 = vmatprep.subr.mxu0 0.0
      %1207 = vmatpush1.msra.mxu0 0.0
      %1208 = vmatprep.subr.mxu0 0.0
      %1209 = vmatpush1.msra.mxu0 0.0
      %1210 = vmatprep.subr.mxu0 0.0
      %1211 = vmatpush1.msra.mxu0 0.0
      %1212 = vmatprep.subr.mxu0 0.0
      %1213 = vmatpush1.msra.mxu0 0.0
      %1214 = vmatprep.subr.mxu0 0.0
      %1215 = vmatpush1.msra.mxu0 0.0
      %1216 = vmatprep.subr.mxu0 0.0
      %1217 = vmatpush1.msra.mxu0 0.0
      %1218 = vmatprep.subr.mxu0 0.0
      %1219 = vmatpush1.msra.mxu0 0.0
      %1220 = vmatprep.subr.mxu0 0.0
      %1221 = vmatpush1.msra.mxu0 0.0
      %1222 = vmatprep.subr.mxu0 0.0
      %1223 = vmatpush1.msra.mxu0 0.0
      %1224 = vmatprep.subr.mxu0 0.0
      %1225 = vmatpush1.msra.mxu0 0.0
      %1226 = vmatprep.subr.mxu0 0.0
      %1227 = vmatpush1.msra.mxu0 0.0
      %1228 = vmatprep.subr.mxu0 0.0
      %1229 = vmatpush1.msra.mxu0 0.0
      %1230 = vmatprep.subr.mxu0 0.0
      %1231 = vmatpush1.msra.mxu0 0.0
      %1232 = vmatprep.subr.mxu0 0.0
      %1233 = vmatpush1.msra.mxu0 0.0
      %1234 = vmatprep.subr.mxu0 0.0
      %1235 = vmatpush1.msra.mxu0 0.0
      %1236 = vmatprep.subr.mxu0 0.0
      %1237 = vmatpush1.msra.mxu0 0.0
      %1238 = vmatprep.subr.mxu0 0.0
      %1239 = vmatpush1.msra.mxu0 0.0
      %1240 = vmatprep.subr.mxu0 0.0
      %1241 = vmatpush1.msra.mxu0 0.0
      %1242 = vmatprep.subr.mxu0 0.0
      %1243 = vmatpush1.msra.mxu0 0.0
      %1244 = vmatprep.subr.mxu0 0.0
      %1245 = vmatpush1.msra.mxu0 0.0
      %1246 = vmatprep.subr.mxu0 0.0
      %1247 = vmatpush1.msra.mxu0 0.0
      %1248 = vmatprep.subr.mxu0 0.0
      %1249 = vmatpush1.msra.mxu0 0.0
      %1250 = vmatprep.subr.mxu0 0.0
      %1251 = vmatpush1.msra.mxu0 0.0
      %1252 = vmatprep.subr.mxu0 0.0
      %1253 = vmatpush1.msra.mxu0 0.0
      %1254 = vmatprep.mubr.f32.mxu0 0.0
      %1255 = vmatmul.mubr.f32.gmra.mrb[0].mxu0 %v1022
      %v1256 = vpop.f32.mrb[0].mxu0
      %v1257 = vadd.f32 %v1017, %v1256
      %v1258 = vpop.f32.mrb[0].mxu0
      %v1259 = vadd.f32 %v1017, %v1258
      %1260 = vdwg.mxu0
      %1261 = vmatprep.subr.mxu0 %v1046
      %1262 = vmatpush1.msra.mxu0 %v1043
      %1263 = vmatprep.subr.mxu0 0.0
      %1264 = vmatpush1.msra.mxu0 0.0
      %1265 = vmatprep.subr.mxu0 0.0
      %1266 = vmatpush1.msra.mxu0 0.0
      %1267 = vmatprep.subr.mxu0 0.0
      %1268 = vmatpush1.msra.mxu0 0.0
      %1269 = vmatprep.subr.mxu0 0.0
      %1270 = vmatpush1.msra.mxu0 0.0
      %1271 = vmatprep.subr.mxu0 0.0
      %1272 = vmatpush1.msra.mxu0 0.0
      %1273 = vmatprep.subr.mxu0 0.0
      %1274 = vmatpush1.msra.mxu0 0.0
      %1275 = vmatprep.subr.mxu0 0.0
      %1276 = vmatpush1.msra.mxu0 0.0
      %1277 = vmatprep.subr.mxu0 0.0
      %1278 = vmatpush1.msra.mxu0 0.0
      %1279 = vmatprep.subr.mxu0 0.0
      %1280 = vmatpush1.msra.mxu0 0.0
      %1281 = vmatprep.subr.mxu0 0.0
      %1282 = vmatpush1.msra.mxu0 0.0
      %1283 = vmatprep.subr.mxu0 0.0
      %1284 = vmatpush1.msra.mxu0 0.0
      %1285 = vmatprep.subr.mxu0 0.0
      %1286 = vmatpush1.msra.mxu0 0.0
      %1287 = vmatprep.subr.mxu0 0.0
      %1288 = vmatpush1.msra.mxu0 0.0
      %1289 = vmatprep.subr.mxu0 0.0
      %1290 = vmatpush1.msra.mxu0 0.0
      %1291 = vmatprep.subr.mxu0 0.0
      %1292 = vmatpush1.msra.mxu0 0.0
      %1293 = vmatprep.subr.mxu0 0.0
      %1294 = vmatpush1.msra.mxu0 0.0
      %1295 = vmatprep.subr.mxu0 0.0
      %1296 = vmatpush1.msra.mxu0 0.0
      %1297 = vmatprep.subr.mxu0 0.0
      %1298 = vmatpush1.msra.mxu0 0.0
      %1299 = vmatprep.subr.mxu0 0.0
      %1300 = vmatpush1.msra.mxu0 0.0
      %1301 = vmatprep.subr.mxu0 0.0
      %1302 = vmatpush1.msra.mxu0 0.0
      %1303 = vmatprep.subr.mxu0 0.0
      %1304 = vmatpush1.msra.mxu0 0.0
      %1305 = vmatprep.subr.mxu0 0.0
      %1306 = vmatpush1.msra.mxu0 0.0
      %1307 = vmatprep.subr.mxu0 0.0
      %1308 = vmatpush1.msra.mxu0 0.0
      %1309 = vmatprep.subr.mxu0 0.0
      %1310 = vmatpush1.msra.mxu0 0.0
      %1311 = vmatprep.subr.mxu0 0.0
      %1312 = vmatpush1.msra.mxu0 0.0
      %1313 = vmatprep.subr.mxu0 0.0
      %1314 = vmatpush1.msra.mxu0 0.0
      %1315 = vmatprep.subr.mxu0 0.0
      %1316 = vmatpush1.msra.mxu0 0.0
      %1317 = vmatprep.subr.mxu0 0.0
      %1318 = vmatpush1.msra.mxu0 0.0
      %1319 = vmatprep.subr.mxu0 0.0
      %1320 = vmatpush1.msra.mxu0 0.0
      %1321 = vmatprep.subr.mxu0 0.0
      %1322 = vmatpush1.msra.mxu0 0.0
      %1323 = vmatprep.subr.mxu0 0.0
      %1324 = vmatpush1.msra.mxu0 0.0
      %1325 = vmatprep.mubr.f32.mxu0 0.0
      %1326 = vmatmul.mubr.f32.gmra.mrb[0].mxu0 %v1022
      %v1327 = vpop.f32.mrb[0].mxu0
      %v1328 = vadd.f32 %v1017, %v1327
      %v1329 = vpop.f32.mrb[0].mxu0
      %v1330 = vadd.f32 %v1017, %v1329
      %1331 = vdwg.mxu0
      %v1332 = vmax.f32 %v1115, 0.0
      %v1333 = vmax.f32 %v1117, 0.0
      %v1334 = vmax.f32 %v1186, 0.0
      %v1335 = vmax.f32 %v1188, 0.0
      %v1336 = vmax.f32 %v1257, 0.0
      %v1337 = vmax.f32 %v1259, 0.0
      %v1338 = vmax.f32 %v1328, 0.0
      %v1339 = vmax.f32 %v1330, 0.0
      %1340 = vset.pattern.permute.xlu0 6
      %1341 = vperm.xlu0 %1340, %v273
      %v1342 = vpop.permute.xlu0 %1341
      %v1344 = vmul.f32 %v1332, %v1342
      %v1345 = vmul.f32 %v1333, %v1342
      %v1346 = vmul.f32 %v1334, %v1342
      %v1347 = vmul.f32 %v1335, %v1342
      %v1348 = vmul.f32 %v1336, %v1342
      %v1349 = vmul.f32 %v1337, %v1342
      %v1350 = vmul.f32 %v1338, %v1342
      %v1351 = vmul.f32 %v1339, %v1342
      %v1352 = vsel %vm671, %v1344, 0.0
      %v1353 = vrot.slane %v1352, 4
      %v1354 = vadd.f32 %v1352, %v1353
      %v1355 = vrot.slane %v1354, 2
      %v1356 = vadd.f32 %v1354, %v1355
      %v1357 = vrot.slane %v1356, 1
      %v1358 = vadd.f32 %v1356, %v1357
      %v1359 = vsel %vm671, %v1345, 0.0
      %v1360 = vrot.slane %v1359, 4
      %v1361 = vadd.f32 %v1359, %v1360
      %v1362 = vrot.slane %v1361, 2
      %v1363 = vadd.f32 %v1361, %v1362
      %v1364 = vrot.slane %v1363, 1
      %v1365 = vadd.f32 %v1363, %v1364
      %v1366 = vsel %vm671, %v1346, 0.0
      %v1367 = vrot.slane %v1366, 4
      %v1368 = vadd.f32 %v1366, %v1367
      %v1369 = vrot.slane %v1368, 2
      %v1370 = vadd.f32 %v1368, %v1369
      %v1371 = vrot.slane %v1370, 1
      %v1372 = vadd.f32 %v1370, %v1371
      %v1373 = vsel %vm671, %v1347, 0.0
      %v1374 = vrot.slane %v1373, 4
      %v1375 = vadd.f32 %v1373, %v1374
      %v1376 = vrot.slane %v1375, 2
      %v1377 = vadd.f32 %v1375, %v1376
      %v1378 = vrot.slane %v1377, 1
      %v1379 = vadd.f32 %v1377, %v1378
      %v1380 = vsel %vm671, %v1348, 0.0
      %v1381 = vrot.slane %v1380, 4
      %v1382 = vadd.f32 %v1380, %v1381
      %v1383 = vrot.slane %v1382, 2
      %v1384 = vadd.f32 %v1382, %v1383
      %v1385 = vrot.slane %v1384, 1
      %v1386 = vadd.f32 %v1384, %v1385
      %v1387 = vsel %vm671, %v1349, 0.0
      %v1388 = vrot.slane %v1387, 4
      %v1389 = vadd.f32 %v1387, %v1388
      %v1390 = vrot.slane %v1389, 2
      %v1391 = vadd.f32 %v1389, %v1390
      %v1392 = vrot.slane %v1391, 1
      %v1393 = vadd.f32 %v1391, %v1392
      %v1394 = vsel %vm671, %v1350, 0.0
      %v1395 = vrot.slane %v1394, 4
      %v1396 = vadd.f32 %v1394, %v1395
      %v1397 = vrot.slane %v1396, 2
      %v1398 = vadd.f32 %v1396, %v1397
      %v1399 = vrot.slane %v1398, 1
      %v1400 = vadd.f32 %v1398, %v1399
      %v1401 = vsel %vm671, %v1351, 0.0
      %v1402 = vrot.slane %v1401, 4
      %v1403 = vadd.f32 %v1401, %v1402
      %v1404 = vrot.slane %v1403, 2
      %v1405 = vadd.f32 %v1403, %v1404
      %v1406 = vrot.slane %v1405, 1
      %v1407 = vadd.f32 %v1405, %v1406
      %1408 = vset.pattern.permute.xlu0 7
      %1409 = vperm.xlu0 %1408, %v273
      %v1410 = vpop.permute.xlu0 %1409
      %v1412 = vadd.f32 %v1358, %v1410
      %v1413 = vadd.f32 %v1365, %v1410
      %v1414 = vadd.f32 %v1372, %v1410
      %v1415 = vadd.f32 %v1379, %v1410
      %v1416 = vadd.f32 %v1386, %v1410
      %v1417 = vadd.f32 %v1393, %v1410
      %v1418 = vadd.f32 %v1400, %v1410
      %v1419 = vadd.f32 %v1407, %v1410
      %v1420 = vsub.f32 0.0, %v1412
      %v1421 = vsub.f32 0.0, %v1413
      %v1422 = vsub.f32 0.0, %v1414
      %v1423 = vsub.f32 0.0, %v1415
      %v1424 = vsub.f32 0.0, %v1416
      %v1425 = vsub.f32 0.0, %v1417
      %v1426 = vsub.f32 0.0, %v1418
      %v1427 = vsub.f32 0.0, %v1419
      %v1428 = vmul.f32 %v1420, 1.442695
      %v1429 = vpow.pop %v1428
      %v1430 = vmul.f32 %v1421, 1.442695
      %v1431 = vpow.pop %v1430
      %v1432 = vmul.f32 %v1422, 1.442695
      %v1433 = vpow.pop %v1432
      %v1434 = vmul.f32 %v1423, 1.442695
      %v1435 = vpow.pop %v1434
      %v1436 = vmul.f32 %v1424, 1.442695
      %v1437 = vpow.pop %v1436
      %v1438 = vmul.f32 %v1425, 1.442695
      %v1439 = vpow.pop %v1438
      %v1440 = vmul.f32 %v1426, 1.442695
      %v1441 = vpow.pop %v1440
      %v1442 = vmul.f32 %v1427, 1.442695
      %v1443 = vpow.pop %v1442
      %v1444 = vadd.f32 %v1429, 1.0
      %v1445 = vadd.f32 %v1431, 1.0
      %v1446 = vadd.f32 %v1433, 1.0
      %v1447 = vadd.f32 %v1435, 1.0
      %v1448 = vadd.f32 %v1437, 1.0
      %v1449 = vadd.f32 %v1439, 1.0
      %v1450 = vadd.f32 %v1441, 1.0
      %v1451 = vadd.f32 %v1443, 1.0
      %v1452 = vrcp.pop %v1444
      %v1453 = vmul.f32 1.0, %v1452
      %v1454 = vrcp.pop %v1445
      %v1455 = vmul.f32 1.0, %v1454
      %v1456 = vrcp.pop %v1446
      %v1457 = vmul.f32 1.0, %v1456
      %v1458 = vrcp.pop %v1447
      %v1459 = vmul.f32 1.0, %v1458
      %v1460 = vrcp.pop %v1448
      %v1461 = vmul.f32 1.0, %v1460
      %v1462 = vrcp.pop %v1449
      %v1463 = vmul.f32 1.0, %v1462
      %v1464 = vrcp.pop %v1450
      %v1465 = vmul.f32 1.0, %v1464
      %v1466 = vrcp.pop %v1451
      %v1467 = vmul.f32 1.0, %v1466
      %v1468 = vlaneseq
      %v1469 = vshrl.u32 %v1468, 7
      %v1470 = vsub.s32 0, %v1469
      %v1471 = vrot.slane %v1453, %v1470
      %v1472 = vlaneseq
      %v1473 = vshrl.u32 %v1472, 7
      %v1474 = vsub.s32 0, %v1473
      %v1475 = vrot.slane %v1455, %v1474
      %v1476 = vlaneseq
      %v1477 = vshrl.u32 %v1476, 7
      %v1478 = vsub.s32 0, %v1477
      %v1479 = vrot.slane %v1457, %v1478
      %v1480 = vlaneseq
      %v1481 = vshrl.u32 %v1480, 7
      %v1482 = vsub.s32 0, %v1481
      %v1483 = vrot.slane %v1459, %v1482
      %v1484 = vlaneseq
      %v1485 = vshrl.u32 %v1484, 7
      %v1486 = vsub.s32 0, %v1485
      %v1487 = vrot.slane %v1461, %v1486
      %v1488 = vlaneseq
      %v1489 = vshrl.u32 %v1488, 7
      %v1490 = vsub.s32 0, %v1489
      %v1491 = vrot.slane %v1463, %v1490
      %v1492 = vlaneseq
      %v1493 = vshrl.u32 %v1492, 7
      %v1494 = vsub.s32 0, %v1493
      %v1495 = vrot.slane %v1465, %v1494
      %v1496 = vlaneseq
      %v1497 = vshrl.u32 %v1496, 7
      %v1498 = vsub.s32 0, %v1497
      %v1499 = vrot.slane %v1467, %v1498
      %v1500 = vmul.f32 %v1471, %v939
      %v1501 = vmul.f32 %v1475, %v940
      %v1502 = vmul.f32 %v1479, %v971
      %v1503 = vmul.f32 %v1483, %v972
      %v1504 = vmul.f32 %v1487, %v1003
      %v1505 = vmul.f32 %v1491, %v1004
      %v1506 = vmul.f32 %v1495, %v1011
      %v1507 = vmul.f32 %v1499, %v1012
      %v1508 = vadd.f32 %v932, %v1500
      %v1509 = vadd.f32 %v933, %v1501
      %v1510 = vadd.f32 %v969, %v1502
      %v1511 = vadd.f32 %v970, %v1503
      %v1512 = vadd.f32 %v1001, %v1504
      %v1513 = vadd.f32 %v1002, %v1505
      %v1514 = vadd.f32 %v1009, %v1506
      %v1515 = vadd.f32 %v1010, %v1507
      %v1524 = vcombine.high %v1508, %v1509
      %v1525 = vcombine.high %v1510, %v1511
      %v1526 = vcombine.high %v1512, %v1513
      %v1527 = vcombine.high %v1514, %v1515
      %1532 = vst [vmem:[%s271] sm:$0xff] %v1524
      %1533 = vst [vmem:[%s271 + $0x8] sm:$0xff] %v1525
      %1534 = vst [vmem:[%s271 + $0x10] sm:$0xff] %v1526
      %1535 = vst [vmem:[%s271 + $0x18] sm:$0xff] %v1527
      %p1536 = scmp.lt.s32.totalorder %s17, 1
      %s1537 = scalar_select %p1536, %s17, 1
      %s1538 = smul.addr %s1537, 8
      %s1539 = smul.addr %s1538, 4
      %s1540 = scalar_lea.vmem %s6, %s1539
      // Predicated region
      $region45: #{upblock_forward.1} parent=43 // pred_check
        %p1541 = pneg %p171
      $region46: #{upblock_forward.1} parent=43 // pred_check_branch
        %1543 = sbr.rel (%p1541) target = $region48
      $region47: #{upblock_forward.1} parent=43 // pred_region
        _
      $region48: #{upblock_forward.1} parent=43 // pred_fallthru
        _
    $region44: #{upblock_forward.1} parent=5 // pred_fallthru
      _
    %p1544 = scmp.le.s32.totalorder 2, %s12
    // Predicated region
    $region49: #{upblock_forward.1} parent=5 // pred_check
      %p1545 = pneg %p1544
    $region50: #{upblock_forward.1} parent=5 // pred_check_branch
      %1547 = sbr.rel (%p1545) target = $region52
    $region51: #{upblock_forward.1} parent=5 // pred_region
      %s1548 = ssub.s32 %s12, 2
      // Predicated region
      $region53: #{upblock_forward.1} parent=51 // pred_check
        %p1549 = pneg %p177
      $region54: #{upblock_forward.1} parent=51 // pred_check_branch
        %1551 = sbr.rel (%p1549) target = $region56
      $region55: #{upblock_forward.1} parent=51 // pred_region
        %p1552 = scmp.lt.s32.totalorder %s18, 1
        %s1553 = scalar_select %p1552, %s18, 1
        %s1554 = smul.addr %s1553, 8
        %s1555 = smul.addr %s1554, 4
        %s1556 = scalar_lea.vmem %s6, %s1555
      $region56: #{upblock_forward.1} parent=51 // pred_fallthru
        _
    $region52: #{upblock_forward.1} parent=5 // pred_fallthru
      _
  $region6: #{upblock_forward.1} parent=0 // loop_footer
    %s16 = sadd.s32 1, %s12
  $region7: #{upblock_forward.1} parent=0 // loop_footer_branch
    %11 = sbr.rel target = $region3
  $region8: #{upblock_forward.1} parent=0 // loop_exit
    _

</llo_original>
